<compile_context>
chip_gen: v7x
topology: tpu7x:2x2x1
jax: 0.10.0
libtpu: 0.0.40
codegen_flags: <defaults>
</compile_context>

<pallas_src>
import functools

import jax
import jax.numpy as jnp
from jax import lax
from jax.experimental import pallas as pl
from jax.experimental.pallas import tpu as pltpu


# ----------------------------- config (small) -------------------------------
class Config:
    n_feat = 16
    hidden = 32
    num_layers = 2
    dropout = 0.0   # TODO(synk): nn.LSTM inter-layer dropout (train mode) not modeled; dropout=0.0 -> eval semantics.
    pooldim = 4
    num_task = 8    # seq length implied by fc in_features = hidden // pooldim * num_task
    num_classes = 5


BATCH = 2


# ------------------------- fused whole-model kernel --------------------------
def fused_lstm_kernel(*refs, hidden, pooldim, num_layers, seq_len, batch):
    # refs layout:
    #   [0]             x_ref    (S*B, F)           time-major, flattened input
    #   [1+3l+0]        wih_l    (IN_l, 4H)         W_ih^T, gate cols [i,f,o,g]
    #   [1+3l+1]        whh_l    (H,    4H)         W_hh^T, gate cols [i,f,o,g]
    #   [1+3l+2]        b_l      (1,    4H)         b_ih + b_hh (permuted)
    #   [1+3L]          wfc      (S*H//pooldim, C)  W_fc^T
    #   [2+3L]          bfc      (1, C)
    #   [3+3L]          out      (B, C)
    H = hidden
    S = seq_len
    B = batch
    HP = H // pooldim

    x_ref = refs[0]
    layer_refs = refs[1:1 + 3 * num_layers]
    wfc_ref = refs[1 + 3 * num_layers]
    bfc_ref = refs[2 + 3 * num_layers]
    out_ref = refs[3 + 3 * num_layers]

    last = num_layers - 1
    seq_in = x_ref[...]                          # whole sequence stays vreg-resident
    flat_h = None

    for l in range(num_layers):
        wih = layer_refs[3 * l][...]             # (IN, 4H)
        whh = layer_refs[3 * l + 1][...]         # (H,  4H)
        b = layer_refs[3 * l + 2][...]           # (1,  4H)

        # Batched input projection for ALL timesteps at once (one MXU op with the
        # bias folded in) — only the recurrent matmul remains inside the t-loop.
        xproj = jnp.dot(seq_in, wih,
                        preferred_element_type=jnp.float32) + b   # (S*B, 4H)

        h = jnp.zeros((B, H), jnp.float32)
        c = jnp.zeros((B, H), jnp.float32)
        hs = []
        for t in range(S):                       # static, fully unrolled (S is tiny)
            gates = xproj[t * B:(t + 1) * B, :] + jnp.dot(
                h, whh, preferred_element_type=jnp.float32)       # (B, 4H), [i|f|o|g]
            sg = jax.nn.sigmoid(gates[:, :3 * H])   # one EUP call for i, f, o
            g = jnp.tanh(gates[:, 3 * H:])          # one EUP call for g
            i = sg[:, :H]
            f = sg[:, H:2 * H]
            o = sg[:, 2 * H:]
            c = f * c + i * g
            h = o * jnp.tanh(c)
            hs.append(h)                            # kept in vregs, no VMEM stores

        if l < last:
            seq_in = jnp.concatenate(hs, axis=0)    # (S*B, H) feeds the next layer
        else:
            flat_h = jnp.concatenate(hs, axis=1)    # (B, S*H) for fused pool+flatten

    # MaxPool1d(pooldim) over the hidden dim + flatten, hoisted off the
    # recurrence critical path (one reshape+reduce instead of S of them).
    pooled = jnp.max(flat_h.reshape(B, S * HP, pooldim), axis=-1)  # (B, S*HP)

    # Final Linear, still inside the kernel.
    out_ref[...] = (jnp.dot(pooled, wfc_ref[...],
                            preferred_element_type=jnp.float32)
                    + bfc_ref[...])


# ------------------------------- wrapper --------------------------------------
def lstm_model_forward(x, kparams, wfc_t, bfc, cfg):
    # x: (B, S, n_feat); kparams: [(W_ih^T, W_hh^T, b)] per layer, gate order [i,f,o,g]
    B, S, F = x.shape
    H = cfg.hidden
    C = wfc_t.shape[1]
    L = len(kparams)

    # Time-major transpose + (S,B,F)->(S*B,F) flatten done in XLA (free), so the
    # kernel sees a 2-D, lane-dense input block and can batch the input projection.
    x_flat = jnp.transpose(x, (1, 0, 2)).reshape(S * B, F)

    in_specs = [pl.BlockSpec((S * B, F), lambda i: (0, 0))]
    flat_args = [x_flat]
    for (wih_t, whh_t, bias) in kparams:
        in_specs += [
            pl.BlockSpec(wih_t.shape, lambda i: (0, 0)),
            pl.BlockSpec(whh_t.shape, lambda i: (0, 0)),
            pl.BlockSpec(bias.shape, lambda i: (0, 0)),
        ]
        flat_args += [wih_t, whh_t, bias]
    in_specs += [
        pl.BlockSpec(wfc_t.shape, lambda i: (0, 0)),
        pl.BlockSpec(bfc.shape, lambda i: (0, 0)),
    ]
    flat_args += [wfc_t, bfc]

    kernel = functools.partial(fused_lstm_kernel, hidden=H, pooldim=cfg.pooldim,
                               num_layers=L, seq_len=S, batch=B)
    # TODO(synk): on v7x a leading batch grid axis marked "parallel" would place the
    # B=2 independent sequences on the two TensorCores (~2x); kept grid=(1,) because
    # on single-TC v5e/v6e that grid would run serially and only add overhead.
    return pl.pallas_call(
        kernel,
        out_shape=jax.ShapeDtypeStruct((B, C), jnp.float32),
        grid=(1,),
        in_specs=in_specs,
        out_specs=pl.BlockSpec((B, C), lambda i: (0, 0)),
        compiler_params=pltpu.CompilerParams(
            dimension_semantics=("arbitrary",)),
    )(*flat_args)


# --------------------------- pure-JAX reference -------------------------------
def reference_forward(x, raw_params, w_fc, b_fc, cfg):
    out = jnp.transpose(x, (1, 0, 2))           # (S, B, F) time-major
    for (w_ih, w_hh, b_ih, b_hh) in raw_params:
        B = out.shape[1]
        H = w_hh.shape[1]

        def step(carry, x_t, w_ih=w_ih, w_hh=w_hh, b_ih=b_ih, b_hh=b_hh):
            h, c = carry
            gates = x_t @ w_ih.T + b_ih + h @ w_hh.T + b_hh
            i, f, g, o = jnp.split(gates, 4, axis=-1)
            i, f, o = jax.nn.sigmoid(i), jax.nn.sigmoid(f), jax.nn.sigmoid(o)
            g = jnp.tanh(g)
            c_new = f * c + i * g
            h_new = o * jnp.tanh(c_new)
            return (h_new, c_new), h_new

        init = (jnp.zeros((B, H), jnp.float32), jnp.zeros((B, H), jnp.float32))
        _, out = lax.scan(step, init, out)
    out = jnp.transpose(out, (1, 0, 2))         # (B, S, H)
    B, S, H = out.shape
    pooled = jnp.max(out.reshape(B, S, H // cfg.pooldim, cfg.pooldim), axis=-1)
    flat = pooled.reshape(B, S * (H // cfg.pooldim))
    return flat @ w_fc.T + b_fc


# --------------------------------- main ---------------------------------------
if __name__ == "__main__":
    cfg = Config()
    B, S, H = BATCH, cfg.num_task, cfg.hidden

    key = jax.random.PRNGKey(0)

    # Raw parameters in PyTorch layout / gate order (i, f, g, o).
    raw_params = []
    in_size = cfg.n_feat
    for _ in range(cfg.num_layers):
        key, k1, k2, k3, k4 = jax.random.split(key, 5)
        scale = 1.0 / jnp.sqrt(H)
        w_ih = jax.random.uniform(k1, (4 * H, in_size), jnp.float32, -scale, scale)
        w_hh = jax.random.uniform(k2, (4 * H, H), jnp.float32, -scale, scale)
        b_ih = jax.random.uniform(k3, (4 * H,), jnp.float32, -scale, scale)
        b_hh = jax.random.uniform(k4, (4 * H,), jnp.float32, -scale, scale)
        raw_params.append((w_ih, w_hh, b_ih, b_hh))
        in_size = H

    fc_in = cfg.hidden // cfg.pooldim * cfg.num_task
    key, k5, k6, kx = jax.random.split(key, 4)
    scale = 1.0 / jnp.sqrt(fc_in)
    w_fc = jax.random.uniform(k5, (cfg.num_classes, fc_in), jnp.float32, -scale, scale)
    b_fc = jax.random.uniform(k6, (cfg.num_classes,), jnp.float32, -scale, scale)

    x = jax.random.normal(kx, (B, S, cfg.n_feat), jnp.float32)

    # Kernel-side parameter prep: permute gate blocks to [i, f, o, g], transpose
    # the weights, and fold the two biases together (all done once, offline).
    perm = jnp.concatenate([jnp.arange(0, H), jnp.arange(H, 2 * H),
                            jnp.arange(3 * H, 4 * H), jnp.arange(2 * H, 3 * H)])
    kparams = [(w_ih[perm].T, w_hh[perm].T, (b_ih + b_hh)[perm].reshape(1, 4 * H))
               for (w_ih, w_hh, b_ih, b_hh) in raw_params]

    fwd = jax.jit(functools.partial(lstm_model_forward, cfg=cfg))
    out = jax.block_until_ready(fwd(x, kparams, w_fc.T, b_fc.reshape(1, -1)))

    ref = jax.block_until_ready(reference_forward(x, raw_params, w_fc, b_fc, cfg))
    assert out.shape == (B, cfg.num_classes)
    assert jnp.allclose(out, ref, rtol=1e-5, atol=1e-5), "mismatch vs reference"

    print("KERNEL_OK")
</pallas_src>

<mosaic_0001>
module attributes {stable_mosaic.version = 11 : i64} {
  func.func @fused_lstm_kernel(%arg0: i32, %arg1: memref<16x16xf32, #tpu.memory_space<vmem>>, %arg2: memref<16x128xf32, #tpu.memory_space<vmem>>, %arg3: memref<32x128xf32, #tpu.memory_space<vmem>>, %arg4: memref<1x128xf32, #tpu.memory_space<vmem>>, %arg5: memref<32x128xf32, #tpu.memory_space<vmem>>, %arg6: memref<32x128xf32, #tpu.memory_space<vmem>>, %arg7: memref<1x128xf32, #tpu.memory_space<vmem>>, %arg8: memref<64x5xf32, #tpu.memory_space<vmem>>, %arg9: memref<1x5xf32, #tpu.memory_space<vmem>>, %arg10: memref<2x5xf32, #tpu.memory_space<vmem>>) attributes {dimension_semantics = [#tpu.dimension_semantics<arbitrary>], iteration_bounds = array<i64: 1>, scalar_prefetch = 0 : i64, scratch_operands = 0 : i64, tpu.core_type = #tpu.core_type<tc>, window_params = [{pipeline_mode = #tpu.pipeline_mode<synchronous>, transform_indices = @transform_0, window_bounds = array<i64: 16, 16>}, {pipeline_mode = #tpu.pipeline_mode<synchronous>, transform_indices = @transform_1, window_bounds = array<i64: 16, 128>}, {pipeline_mode = #tpu.pipeline_mode<synchronous>, transform_indices = @transform_2, window_bounds = array<i64: 32, 128>}, {pipeline_mode = #tpu.pipeline_mode<synchronous>, transform_indices = @transform_3, window_bounds = array<i64: 1, 128>}, {pipeline_mode = #tpu.pipeline_mode<synchronous>, transform_indices = @transform_4, window_bounds = array<i64: 32, 128>}, {pipeline_mode = #tpu.pipeline_mode<synchronous>, transform_indices = @transform_5, window_bounds = array<i64: 32, 128>}, {pipeline_mode = #tpu.pipeline_mode<synchronous>, transform_indices = @transform_6, window_bounds = array<i64: 1, 128>}, {pipeline_mode = #tpu.pipeline_mode<synchronous>, transform_indices = @transform_7, window_bounds = array<i64: 64, 5>}, {pipeline_mode = #tpu.pipeline_mode<synchronous>, transform_indices = @transform_8, window_bounds = array<i64: 1, 5>}, {pipeline_mode = #tpu.pipeline_mode<synchronous>, transform_indices = @transform_9, window_bounds = array<i64: 2, 5>}]} {
    %c0 = arith.constant 0 : index
    %c0_0 = arith.constant 0 : index
    %0 = vector.load %arg1[%c0, %c0_0] : memref<16x16xf32, #tpu.memory_space<vmem>>, vector<16x16xf32>
    %c0_1 = arith.constant 0 : index
    %c0_2 = arith.constant 0 : index
    %1 = vector.load %arg2[%c0_1, %c0_2] : memref<16x128xf32, #tpu.memory_space<vmem>>, vector<16x128xf32>
    %c0_3 = arith.constant 0 : index
    %c0_4 = arith.constant 0 : index
    %2 = vector.load %arg3[%c0_3, %c0_4] : memref<32x128xf32, #tpu.memory_space<vmem>>, vector<32x128xf32>
    %c0_5 = arith.constant 0 : index
    %c0_6 = arith.constant 0 : index
    %3 = vector.load %arg4[%c0_5, %c0_6] : memref<1x128xf32, #tpu.memory_space<vmem>>, vector<1x128xf32>
    %cst = arith.constant dense<0.000000e+00> : vector<16x128xf32>
    %4 = tpu.matmul %0, %1, %cst {dimension_numbers = #tpu.dot_dimension_numbers<[1], [0], [0], [1], [0, 0, 1, 1], [], []>} : vector<16x16xf32>, vector<16x128xf32>, vector<16x128xf32> -> vector<16x128xf32>
    %5 = vector.broadcast %3 : vector<1x128xf32> to vector<16x128xf32>
    %6 = arith.addf %4, %5 : vector<16x128xf32>
    %cst_7 = arith.constant 0.000000e+00 : f32
    %7 = vector.broadcast %cst_7 : f32 to vector<2x32xf32>
    %cst_8 = arith.constant 0.000000e+00 : f32
    %8 = vector.broadcast %cst_8 : f32 to vector<2x32xf32>
    %9 = vector.extract_strided_slice %6 {offsets = [0, 0], sizes = [2, 128], strides = [1, 1]} : vector<16x128xf32> to vector<2x128xf32>
    %cst_9 = arith.constant dense<0.000000e+00> : vector<2x128xf32>
    %10 = tpu.matmul %7, %2, %cst_9 {dimension_numbers = #tpu.dot_dimension_numbers<[1], [0], [0], [1], [0, 0, 1, 1], [], []>} : vector<2x32xf32>, vector<32x128xf32>, vector<2x128xf32> -> vector<2x128xf32>
    %11 = arith.addf %9, %10 : vector<2x128xf32>
    %12 = vector.extract_strided_slice %11 {offsets = [0, 0], sizes = [2, 96], strides = [1, 1]} : vector<2x128xf32> to vector<2x96xf32>
    %13 = arith.negf %12 : vector<2x96xf32>
    %14 = math.exp %13 : vector<2x96xf32>
    %cst_10 = arith.constant 1.000000e+00 : f32
    %15 = vector.broadcast %cst_10 : f32 to vector<2x96xf32>
    %16 = arith.addf %15, %14 : vector<2x96xf32>
    %17 = arith.divf %15, %16 : vector<2x96xf32>
    %18 = vector.extract_strided_slice %11 {offsets = [0, 96], sizes = [2, 32], strides = [1, 1]} : vector<2x128xf32> to vector<2x32xf32>
    %19 = math.tanh %18 : vector<2x32xf32>
    %20 = vector.extract_strided_slice %17 {offsets = [0, 0], sizes = [2, 32], strides = [1, 1]} : vector<2x96xf32> to vector<2x32xf32>
    %21 = vector.extract_strided_slice %17 {offsets = [0, 32], sizes = [2, 32], strides = [1, 1]} : vector<2x96xf32> to vector<2x32xf32>
    %22 = vector.extract_strided_slice %17 {offsets = [0, 64], sizes = [2, 32], strides = [1, 1]} : vector<2x96xf32> to vector<2x32xf32>
    %23 = arith.mulf %21, %8 : vector<2x32xf32>
    %24 = arith.mulf %20, %19 : vector<2x32xf32>
    %25 = arith.addf %23, %24 : vector<2x32xf32>
    %26 = math.tanh %25 : vector<2x32xf32>
    %27 = arith.mulf %22, %26 : vector<2x32xf32>
    %28 = vector.extract_strided_slice %6 {offsets = [2, 0], sizes = [2, 128], strides = [1, 1]} : vector<16x128xf32> to vector<2x128xf32>
    %cst_11 = arith.constant dense<0.000000e+00> : vector<2x128xf32>
    %29 = tpu.matmul %27, %2, %cst_11 {dimension_numbers = #tpu.dot_dimension_numbers<[1], [0], [0], [1], [0, 0, 1, 1], [], []>} : vector<2x32xf32>, vector<32x128xf32>, vector<2x128xf32> -> vector<2x128xf32>
    %30 = arith.addf %28, %29 : vector<2x128xf32>
    %31 = vector.extract_strided_slice %30 {offsets = [0, 0], sizes = [2, 96], strides = [1, 1]} : vector<2x128xf32> to vector<2x96xf32>
    %32 = arith.negf %31 : vector<2x96xf32>
    %33 = math.exp %32 : vector<2x96xf32>
    %cst_12 = arith.constant 1.000000e+00 : f32
    %34 = vector.broadcast %cst_12 : f32 to vector<2x96xf32>
    %35 = arith.addf %34, %33 : vector<2x96xf32>
    %36 = arith.divf %34, %35 : vector<2x96xf32>
    %37 = vector.extract_strided_slice %30 {offsets = [0, 96], sizes = [2, 32], strides = [1, 1]} : vector<2x128xf32> to vector<2x32xf32>
    %38 = math.tanh %37 : vector<2x32xf32>
    %39 = vector.extract_strided_slice %36 {offsets = [0, 0], sizes = [2, 32], strides = [1, 1]} : vector<2x96xf32> to vector<2x32xf32>
    %40 = vector.extract_strided_slice %36 {offsets = [0, 32], sizes = [2, 32], strides = [1, 1]} : vector<2x96xf32> to vector<2x32xf32>
    %41 = vector.extract_strided_slice %36 {offsets = [0, 64], sizes = [2, 32], strides = [1, 1]} : vector<2x96xf32> to vector<2x32xf32>
    %42 = arith.mulf %40, %25 : vector<2x32xf32>
    %43 = arith.mulf %39, %38 : vector<2x32xf32>
    %44 = arith.addf %42, %43 : vector<2x32xf32>
    %45 = math.tanh %44 : vector<2x32xf32>
    %46 = arith.mulf %41, %45 : vector<2x32xf32>
    %47 = vector.extract_strided_slice %6 {offsets = [4, 0], sizes = [2, 128], strides = [1, 1]} : vector<16x128xf32> to vector<2x128xf32>
    %cst_13 = arith.constant dense<0.000000e+00> : vector<2x128xf32>
    %48 = tpu.matmul %46, %2, %cst_13 {dimension_numbers = #tpu.dot_dimension_numbers<[1], [0], [0], [1], [0, 0, 1, 1], [], []>} : vector<2x32xf32>, vector<32x128xf32>, vector<2x128xf32> -> vector<2x128xf32>
    %49 = arith.addf %47, %48 : vector<2x128xf32>
    %50 = vector.extract_strided_slice %49 {offsets = [0, 0], sizes = [2, 96], strides = [1, 1]} : vector<2x128xf32> to vector<2x96xf32>
    %51 = arith.negf %50 : vector<2x96xf32>
    %52 = math.exp %51 : vector<2x96xf32>
    %cst_14 = arith.constant 1.000000e+00 : f32
    %53 = vector.broadcast %cst_14 : f32 to vector<2x96xf32>
    %54 = arith.addf %53, %52 : vector<2x96xf32>
    %55 = arith.divf %53, %54 : vector<2x96xf32>
    %56 = vector.extract_strided_slice %49 {offsets = [0, 96], sizes = [2, 32], strides = [1, 1]} : vector<2x128xf32> to vector<2x32xf32>
    %57 = math.tanh %56 : vector<2x32xf32>
    %58 = vector.extract_strided_slice %55 {offsets = [0, 0], sizes = [2, 32], strides = [1, 1]} : vector<2x96xf32> to vector<2x32xf32>
    %59 = vector.extract_strided_slice %55 {offsets = [0, 32], sizes = [2, 32], strides = [1, 1]} : vector<2x96xf32> to vector<2x32xf32>
    %60 = vector.extract_strided_slice %55 {offsets = [0, 64], sizes = [2, 32], strides = [1, 1]} : vector<2x96xf32> to vector<2x32xf32>
    %61 = arith.mulf %59, %44 : vector<2x32xf32>
    %62 = arith.mulf %58, %57 : vector<2x32xf32>
    %63 = arith.addf %61, %62 : vector<2x32xf32>
    %64 = math.tanh %63 : vector<2x32xf32>
    %65 = arith.mulf %60, %64 : vector<2x32xf32>
    %66 = vector.extract_strided_slice %6 {offsets = [6, 0], sizes = [2, 128], strides = [1, 1]} : vector<16x128xf32> to vector<2x128xf32>
    %cst_15 = arith.constant dense<0.000000e+00> : vector<2x128xf32>
    %67 = tpu.matmul %65, %2, %cst_15 {dimension_numbers = #tpu.dot_dimension_numbers<[1], [0], [0], [1], [0, 0, 1, 1], [], []>} : vector<2x32xf32>, vector<32x128xf32>, vector<2x128xf32> -> vector<2x128xf32>
    %68 = arith.addf %66, %67 : vector<2x128xf32>
    %69 = vector.extract_strided_slice %68 {offsets = [0, 0], sizes = [2, 96], strides = [1, 1]} : vector<2x128xf32> to vector<2x96xf32>
    %70 = arith.negf %69 : vector<2x96xf32>
    %71 = math.exp %70 : vector<2x96xf32>
    %cst_16 = arith.constant 1.000000e+00 : f32
    %72 = vector.broadcast %cst_16 : f32 to vector<2x96xf32>
    %73 = arith.addf %72, %71 : vector<2x96xf32>
    %74 = arith.divf %72, %73 : vector<2x96xf32>
    %75 = vector.extract_strided_slice %68 {offsets = [0, 96], sizes = [2, 32], strides = [1, 1]} : vector<2x128xf32> to vector<2x32xf32>
    %76 = math.tanh %75 : vector<2x32xf32>
    %77 = vector.extract_strided_slice %74 {offsets = [0, 0], sizes = [2, 32], strides = [1, 1]} : vector<2x96xf32> to vector<2x32xf32>
    %78 = vector.extract_strided_slice %74 {offsets = [0, 32], sizes = [2, 32], strides = [1, 1]} : vector<2x96xf32> to vector<2x32xf32>
    %79 = vector.extract_strided_slice %74 {offsets = [0, 64], sizes = [2, 32], strides = [1, 1]} : vector<2x96xf32> to vector<2x32xf32>
    %80 = arith.mulf %78, %63 : vector<2x32xf32>
    %81 = arith.mulf %77, %76 : vector<2x32xf32>
    %82 = arith.addf %80, %81 : vector<2x32xf32>
    %83 = math.tanh %82 : vector<2x32xf32>
    %84 = arith.mulf %79, %83 : vector<2x32xf32>
    %85 = vector.extract_strided_slice %6 {offsets = [8, 0], sizes = [2, 128], strides = [1, 1]} : vector<16x128xf32> to vector<2x128xf32>
    %cst_17 = arith.constant dense<0.000000e+00> : vector<2x128xf32>
    %86 = tpu.matmul %84, %2, %cst_17 {dimension_numbers = #tpu.dot_dimension_numbers<[1], [0], [0], [1], [0, 0, 1, 1], [], []>} : vector<2x32xf32>, vector<32x128xf32>, vector<2x128xf32> -> vector<2x128xf32>
    %87 = arith.addf %85, %86 : vector<2x128xf32>
    %88 = vector.extract_strided_slice %87 {offsets = [0, 0], sizes = [2, 96], strides = [1, 1]} : vector<2x128xf32> to vector<2x96xf32>
    %89 = arith.negf %88 : vector<2x96xf32>
    %90 = math.exp %89 : vector<2x96xf32>
    %cst_18 = arith.constant 1.000000e+00 : f32
    %91 = vector.broadcast %cst_18 : f32 to vector<2x96xf32>
    %92 = arith.addf %91, %90 : vector<2x96xf32>
    %93 = arith.divf %91, %92 : vector<2x96xf32>
    %94 = vector.extract_strided_slice %87 {offsets = [0, 96], sizes = [2, 32], strides = [1, 1]} : vector<2x128xf32> to vector<2x32xf32>
    %95 = math.tanh %94 : vector<2x32xf32>
    %96 = vector.extract_strided_slice %93 {offsets = [0, 0], sizes = [2, 32], strides = [1, 1]} : vector<2x96xf32> to vector<2x32xf32>
    %97 = vector.extract_strided_slice %93 {offsets = [0, 32], sizes = [2, 32], strides = [1, 1]} : vector<2x96xf32> to vector<2x32xf32>
    %98 = vector.extract_strided_slice %93 {offsets = [0, 64], sizes = [2, 32], strides = [1, 1]} : vector<2x96xf32> to vector<2x32xf32>
    %99 = arith.mulf %97, %82 : vector<2x32xf32>
    %100 = arith.mulf %96, %95 : vector<2x32xf32>
    %101 = arith.addf %99, %100 : vector<2x32xf32>
    %102 = math.tanh %101 : vector<2x32xf32>
    %103 = arith.mulf %98, %102 : vector<2x32xf32>
    %104 = vector.extract_strided_slice %6 {offsets = [10, 0], sizes = [2, 128], strides = [1, 1]} : vector<16x128xf32> to vector<2x128xf32>
    %cst_19 = arith.constant dense<0.000000e+00> : vector<2x128xf32>
    %105 = tpu.matmul %103, %2, %cst_19 {dimension_numbers = #tpu.dot_dimension_numbers<[1], [0], [0], [1], [0, 0, 1, 1], [], []>} : vector<2x32xf32>, vector<32x128xf32>, vector<2x128xf32> -> vector<2x128xf32>
    %106 = arith.addf %104, %105 : vector<2x128xf32>
    %107 = vector.extract_strided_slice %106 {offsets = [0, 0], sizes = [2, 96], strides = [1, 1]} : vector<2x128xf32> to vector<2x96xf32>
    %108 = arith.negf %107 : vector<2x96xf32>
    %109 = math.exp %108 : vector<2x96xf32>
    %cst_20 = arith.constant 1.000000e+00 : f32
    %110 = vector.broadcast %cst_20 : f32 to vector<2x96xf32>
    %111 = arith.addf %110, %109 : vector<2x96xf32>
    %112 = arith.divf %110, %111 : vector<2x96xf32>
    %113 = vector.extract_strided_slice %106 {offsets = [0, 96], sizes = [2, 32], strides = [1, 1]} : vector<2x128xf32> to vector<2x32xf32>
    %114 = math.tanh %113 : vector<2x32xf32>
    %115 = vector.extract_strided_slice %112 {offsets = [0, 0], sizes = [2, 32], strides = [1, 1]} : vector<2x96xf32> to vector<2x32xf32>
    %116 = vector.extract_strided_slice %112 {offsets = [0, 32], sizes = [2, 32], strides = [1, 1]} : vector<2x96xf32> to vector<2x32xf32>
    %117 = vector.extract_strided_slice %112 {offsets = [0, 64], sizes = [2, 32], strides = [1, 1]} : vector<2x96xf32> to vector<2x32xf32>
    %118 = arith.mulf %116, %101 : vector<2x32xf32>
    %119 = arith.mulf %115, %114 : vector<2x32xf32>
    %120 = arith.addf %118, %119 : vector<2x32xf32>
    %121 = math.tanh %120 : vector<2x32xf32>
    %122 = arith.mulf %117, %121 : vector<2x32xf32>
    %123 = vector.extract_strided_slice %6 {offsets = [12, 0], sizes = [2, 128], strides = [1, 1]} : vector<16x128xf32> to vector<2x128xf32>
    %cst_21 = arith.constant dense<0.000000e+00> : vector<2x128xf32>
    %124 = tpu.matmul %122, %2, %cst_21 {dimension_numbers = #tpu.dot_dimension_numbers<[1], [0], [0], [1], [0, 0, 1, 1], [], []>} : vector<2x32xf32>, vector<32x128xf32>, vector<2x128xf32> -> vector<2x128xf32>
    %125 = arith.addf %123, %124 : vector<2x128xf32>
    %126 = vector.extract_strided_slice %125 {offsets = [0, 0], sizes = [2, 96], strides = [1, 1]} : vector<2x128xf32> to vector<2x96xf32>
    %127 = arith.negf %126 : vector<2x96xf32>
    %128 = math.exp %127 : vector<2x96xf32>
    %cst_22 = arith.constant 1.000000e+00 : f32
    %129 = vector.broadcast %cst_22 : f32 to vector<2x96xf32>
    %130 = arith.addf %129, %128 : vector<2x96xf32>
    %131 = arith.divf %129, %130 : vector<2x96xf32>
    %132 = vector.extract_strided_slice %125 {offsets = [0, 96], sizes = [2, 32], strides = [1, 1]} : vector<2x128xf32> to vector<2x32xf32>
    %133 = math.tanh %132 : vector<2x32xf32>
    %134 = vector.extract_strided_slice %131 {offsets = [0, 0], sizes = [2, 32], strides = [1, 1]} : vector<2x96xf32> to vector<2x32xf32>
    %135 = vector.extract_strided_slice %131 {offsets = [0, 32], sizes = [2, 32], strides = [1, 1]} : vector<2x96xf32> to vector<2x32xf32>
    %136 = vector.extract_strided_slice %131 {offsets = [0, 64], sizes = [2, 32], strides = [1, 1]} : vector<2x96xf32> to vector<2x32xf32>
    %137 = arith.mulf %135, %120 : vector<2x32xf32>
    %138 = arith.mulf %134, %133 : vector<2x32xf32>
    %139 = arith.addf %137, %138 : vector<2x32xf32>
    %140 = math.tanh %139 : vector<2x32xf32>
    %141 = arith.mulf %136, %140 : vector<2x32xf32>
    %142 = vector.extract_strided_slice %6 {offsets = [14, 0], sizes = [2, 128], strides = [1, 1]} : vector<16x128xf32> to vector<2x128xf32>
    %cst_23 = arith.constant dense<0.000000e+00> : vector<2x128xf32>
    %143 = tpu.matmul %141, %2, %cst_23 {dimension_numbers = #tpu.dot_dimension_numbers<[1], [0], [0], [1], [0, 0, 1, 1], [], []>} : vector<2x32xf32>, vector<32x128xf32>, vector<2x128xf32> -> vector<2x128xf32>
    %144 = arith.addf %142, %143 : vector<2x128xf32>
    %145 = vector.extract_strided_slice %144 {offsets = [0, 0], sizes = [2, 96], strides = [1, 1]} : vector<2x128xf32> to vector<2x96xf32>
    %146 = arith.negf %145 : vector<2x96xf32>
    %147 = math.exp %146 : vector<2x96xf32>
    %cst_24 = arith.constant 1.000000e+00 : f32
    %148 = vector.broadcast %cst_24 : f32 to vector<2x96xf32>
    %149 = arith.addf %148, %147 : vector<2x96xf32>
    %150 = arith.divf %148, %149 : vector<2x96xf32>
    %151 = vector.extract_strided_slice %144 {offsets = [0, 96], sizes = [2, 32], strides = [1, 1]} : vector<2x128xf32> to vector<2x32xf32>
    %152 = math.tanh %151 : vector<2x32xf32>
    %153 = vector.extract_strided_slice %150 {offsets = [0, 0], sizes = [2, 32], strides = [1, 1]} : vector<2x96xf32> to vector<2x32xf32>
    %154 = vector.extract_strided_slice %150 {offsets = [0, 32], sizes = [2, 32], strides = [1, 1]} : vector<2x96xf32> to vector<2x32xf32>
    %155 = vector.extract_strided_slice %150 {offsets = [0, 64], sizes = [2, 32], strides = [1, 1]} : vector<2x96xf32> to vector<2x32xf32>
    %156 = arith.mulf %154, %139 : vector<2x32xf32>
    %157 = arith.mulf %153, %152 : vector<2x32xf32>
    %158 = arith.addf %156, %157 : vector<2x32xf32>
    %159 = math.tanh %158 : vector<2x32xf32>
    %160 = arith.mulf %155, %159 : vector<2x32xf32>
    %161 = tpu.concatenate %27, %46, %65, %84, %103, %122, %141, %160 in 0 : vector<2x32xf32>, vector<2x32xf32>, vector<2x32xf32>, vector<2x32xf32>, vector<2x32xf32>, vector<2x32xf32>, vector<2x32xf32>, vector<2x32xf32> -> vector<16x32xf32>
    %c0_25 = arith.constant 0 : index
    %c0_26 = arith.constant 0 : index
    %162 = vector.load %arg5[%c0_25, %c0_26] : memref<32x128xf32, #tpu.memory_space<vmem>>, vector<32x128xf32>
    %c0_27 = arith.constant 0 : index
    %c0_28 = arith.constant 0 : index
    %163 = vector.load %arg6[%c0_27, %c0_28] : memref<32x128xf32, #tpu.memory_space<vmem>>, vector<32x128xf32>
    %c0_29 = arith.constant 0 : index
    %c0_30 = arith.constant 0 : index
    %164 = vector.load %arg7[%c0_29, %c0_30] : memref<1x128xf32, #tpu.memory_space<vmem>>, vector<1x128xf32>
    %cst_31 = arith.constant dense<0.000000e+00> : vector<16x128xf32>
    %165 = tpu.matmul %161, %162, %cst_31 {dimension_numbers = #tpu.dot_dimension_numbers<[1], [0], [0], [1], [0, 0, 1, 1], [], []>} : vector<16x32xf32>, vector<32x128xf32>, vector<16x128xf32> -> vector<16x128xf32>
    %166 = vector.broadcast %164 : vector<1x128xf32> to vector<16x128xf32>
    %167 = arith.addf %165, %166 : vector<16x128xf32>
    %cst_32 = arith.constant 0.000000e+00 : f32
    %168 = vector.broadcast %cst_32 : f32 to vector<2x32xf32>
    %cst_33 = arith.constant 0.000000e+00 : f32
    %169 = vector.broadcast %cst_33 : f32 to vector<2x32xf32>
    %170 = vector.extract_strided_slice %167 {offsets = [0, 0], sizes = [2, 128], strides = [1, 1]} : vector<16x128xf32> to vector<2x128xf32>
    %cst_34 = arith.constant dense<0.000000e+00> : vector<2x128xf32>
    %171 = tpu.matmul %168, %163, %cst_34 {dimension_numbers = #tpu.dot_dimension_numbers<[1], [0], [0], [1], [0, 0, 1, 1], [], []>} : vector<2x32xf32>, vector<32x128xf32>, vector<2x128xf32> -> vector<2x128xf32>
    %172 = arith.addf %170, %171 : vector<2x128xf32>
    %173 = vector.extract_strided_slice %172 {offsets = [0, 0], sizes = [2, 96], strides = [1, 1]} : vector<2x128xf32> to vector<2x96xf32>
    %174 = arith.negf %173 : vector<2x96xf32>
    %175 = math.exp %174 : vector<2x96xf32>
    %cst_35 = arith.constant 1.000000e+00 : f32
    %176 = vector.broadcast %cst_35 : f32 to vector<2x96xf32>
    %177 = arith.addf %176, %175 : vector<2x96xf32>
    %178 = arith.divf %176, %177 : vector<2x96xf32>
    %179 = vector.extract_strided_slice %172 {offsets = [0, 96], sizes = [2, 32], strides = [1, 1]} : vector<2x128xf32> to vector<2x32xf32>
    %180 = math.tanh %179 : vector<2x32xf32>
    %181 = vector.extract_strided_slice %178 {offsets = [0, 0], sizes = [2, 32], strides = [1, 1]} : vector<2x96xf32> to vector<2x32xf32>
    %182 = vector.extract_strided_slice %178 {offsets = [0, 32], sizes = [2, 32], strides = [1, 1]} : vector<2x96xf32> to vector<2x32xf32>
    %183 = vector.extract_strided_slice %178 {offsets = [0, 64], sizes = [2, 32], strides = [1, 1]} : vector<2x96xf32> to vector<2x32xf32>
    %184 = arith.mulf %182, %169 : vector<2x32xf32>
    %185 = arith.mulf %181, %180 : vector<2x32xf32>
    %186 = arith.addf %184, %185 : vector<2x32xf32>
    %187 = math.tanh %186 : vector<2x32xf32>
    %188 = arith.mulf %183, %187 : vector<2x32xf32>
    %189 = vector.extract_strided_slice %167 {offsets = [2, 0], sizes = [2, 128], strides = [1, 1]} : vector<16x128xf32> to vector<2x128xf32>
    %cst_36 = arith.constant dense<0.000000e+00> : vector<2x128xf32>
    %190 = tpu.matmul %188, %163, %cst_36 {dimension_numbers = #tpu.dot_dimension_numbers<[1], [0], [0], [1], [0, 0, 1, 1], [], []>} : vector<2x32xf32>, vector<32x128xf32>, vector<2x128xf32> -> vector<2x128xf32>
    %191 = arith.addf %189, %190 : vector<2x128xf32>
    %192 = vector.extract_strided_slice %191 {offsets = [0, 0], sizes = [2, 96], strides = [1, 1]} : vector<2x128xf32> to vector<2x96xf32>
    %193 = arith.negf %192 : vector<2x96xf32>
    %194 = math.exp %193 : vector<2x96xf32>
    %cst_37 = arith.constant 1.000000e+00 : f32
    %195 = vector.broadcast %cst_37 : f32 to vector<2x96xf32>
    %196 = arith.addf %195, %194 : vector<2x96xf32>
    %197 = arith.divf %195, %196 : vector<2x96xf32>
    %198 = vector.extract_strided_slice %191 {offsets = [0, 96], sizes = [2, 32], strides = [1, 1]} : vector<2x128xf32> to vector<2x32xf32>
    %199 = math.tanh %198 : vector<2x32xf32>
    %200 = vector.extract_strided_slice %197 {offsets = [0, 0], sizes = [2, 32], strides = [1, 1]} : vector<2x96xf32> to vector<2x32xf32>
    %201 = vector.extract_strided_slice %197 {offsets = [0, 32], sizes = [2, 32], strides = [1, 1]} : vector<2x96xf32> to vector<2x32xf32>
    %202 = vector.extract_strided_slice %197 {offsets = [0, 64], sizes = [2, 32], strides = [1, 1]} : vector<2x96xf32> to vector<2x32xf32>
    %203 = arith.mulf %201, %186 : vector<2x32xf32>
    %204 = arith.mulf %200, %199 : vector<2x32xf32>
    %205 = arith.addf %203, %204 : vector<2x32xf32>
    %206 = math.tanh %205 : vector<2x32xf32>
    %207 = arith.mulf %202, %206 : vector<2x32xf32>
    %208 = vector.extract_strided_slice %167 {offsets = [4, 0], sizes = [2, 128], strides = [1, 1]} : vector<16x128xf32> to vector<2x128xf32>
    %cst_38 = arith.constant dense<0.000000e+00> : vector<2x128xf32>
    %209 = tpu.matmul %207, %163, %cst_38 {dimension_numbers = #tpu.dot_dimension_numbers<[1], [0], [0], [1], [0, 0, 1, 1], [], []>} : vector<2x32xf32>, vector<32x128xf32>, vector<2x128xf32> -> vector<2x128xf32>
    %210 = arith.addf %208, %209 : vector<2x128xf32>
    %211 = vector.extract_strided_slice %210 {offsets = [0, 0], sizes = [2, 96], strides = [1, 1]} : vector<2x128xf32> to vector<2x96xf32>
    %212 = arith.negf %211 : vector<2x96xf32>
    %213 = math.exp %212 : vector<2x96xf32>
    %cst_39 = arith.constant 1.000000e+00 : f32
    %214 = vector.broadcast %cst_39 : f32 to vector<2x96xf32>
    %215 = arith.addf %214, %213 : vector<2x96xf32>
    %216 = arith.divf %214, %215 : vector<2x96xf32>
    %217 = vector.extract_strided_slice %210 {offsets = [0, 96], sizes = [2, 32], strides = [1, 1]} : vector<2x128xf32> to vector<2x32xf32>
    %218 = math.tanh %217 : vector<2x32xf32>
    %219 = vector.extract_strided_slice %216 {offsets = [0, 0], sizes = [2, 32], strides = [1, 1]} : vector<2x96xf32> to vector<2x32xf32>
    %220 = vector.extract_strided_slice %216 {offsets = [0, 32], sizes = [2, 32], strides = [1, 1]} : vector<2x96xf32> to vector<2x32xf32>
    %221 = vector.extract_strided_slice %216 {offsets = [0, 64], sizes = [2, 32], strides = [1, 1]} : vector<2x96xf32> to vector<2x32xf32>
    %222 = arith.mulf %220, %205 : vector<2x32xf32>
    %223 = arith.mulf %219, %218 : vector<2x32xf32>
    %224 = arith.addf %222, %223 : vector<2x32xf32>
    %225 = math.tanh %224 : vector<2x32xf32>
    %226 = arith.mulf %221, %225 : vector<2x32xf32>
    %227 = vector.extract_strided_slice %167 {offsets = [6, 0], sizes = [2, 128], strides = [1, 1]} : vector<16x128xf32> to vector<2x128xf32>
    %cst_40 = arith.constant dense<0.000000e+00> : vector<2x128xf32>
    %228 = tpu.matmul %226, %163, %cst_40 {dimension_numbers = #tpu.dot_dimension_numbers<[1], [0], [0], [1], [0, 0, 1, 1], [], []>} : vector<2x32xf32>, vector<32x128xf32>, vector<2x128xf32> -> vector<2x128xf32>
    %229 = arith.addf %227, %228 : vector<2x128xf32>
    %230 = vector.extract_strided_slice %229 {offsets = [0, 0], sizes = [2, 96], strides = [1, 1]} : vector<2x128xf32> to vector<2x96xf32>
    %231 = arith.negf %230 : vector<2x96xf32>
    %232 = math.exp %231 : vector<2x96xf32>
    %cst_41 = arith.constant 1.000000e+00 : f32
    %233 = vector.broadcast %cst_41 : f32 to vector<2x96xf32>
    %234 = arith.addf %233, %232 : vector<2x96xf32>
    %235 = arith.divf %233, %234 : vector<2x96xf32>
    %236 = vector.extract_strided_slice %229 {offsets = [0, 96], sizes = [2, 32], strides = [1, 1]} : vector<2x128xf32> to vector<2x32xf32>
    %237 = math.tanh %236 : vector<2x32xf32>
    %238 = vector.extract_strided_slice %235 {offsets = [0, 0], sizes = [2, 32], strides = [1, 1]} : vector<2x96xf32> to vector<2x32xf32>
    %239 = vector.extract_strided_slice %235 {offsets = [0, 32], sizes = [2, 32], strides = [1, 1]} : vector<2x96xf32> to vector<2x32xf32>
    %240 = vector.extract_strided_slice %235 {offsets = [0, 64], sizes = [2, 32], strides = [1, 1]} : vector<2x96xf32> to vector<2x32xf32>
    %241 = arith.mulf %239, %224 : vector<2x32xf32>
    %242 = arith.mulf %238, %237 : vector<2x32xf32>
    %243 = arith.addf %241, %242 : vector<2x32xf32>
    %244 = math.tanh %243 : vector<2x32xf32>
    %245 = arith.mulf %240, %244 : vector<2x32xf32>
    %246 = vector.extract_strided_slice %167 {offsets = [8, 0], sizes = [2, 128], strides = [1, 1]} : vector<16x128xf32> to vector<2x128xf32>
    %cst_42 = arith.constant dense<0.000000e+00> : vector<2x128xf32>
    %247 = tpu.matmul %245, %163, %cst_42 {dimension_numbers = #tpu.dot_dimension_numbers<[1], [0], [0], [1], [0, 0, 1, 1], [], []>} : vector<2x32xf32>, vector<32x128xf32>, vector<2x128xf32> -> vector<2x128xf32>
    %248 = arith.addf %246, %247 : vector<2x128xf32>
    %249 = vector.extract_strided_slice %248 {offsets = [0, 0], sizes = [2, 96], strides = [1, 1]} : vector<2x128xf32> to vector<2x96xf32>
    %250 = arith.negf %249 : vector<2x96xf32>
    %251 = math.exp %250 : vector<2x96xf32>
    %cst_43 = arith.constant 1.000000e+00 : f32
    %252 = vector.broadcast %cst_43 : f32 to vector<2x96xf32>
    %253 = arith.addf %252, %251 : vector<2x96xf32>
    %254 = arith.divf %252, %253 : vector<2x96xf32>
    %255 = vector.extract_strided_slice %248 {offsets = [0, 96], sizes = [2, 32], strides = [1, 1]} : vector<2x128xf32> to vector<2x32xf32>
    %256 = math.tanh %255 : vector<2x32xf32>
    %257 = vector.extract_strided_slice %254 {offsets = [0, 0], sizes = [2, 32], strides = [1, 1]} : vector<2x96xf32> to vector<2x32xf32>
    %258 = vector.extract_strided_slice %254 {offsets = [0, 32], sizes = [2, 32], strides = [1, 1]} : vector<2x96xf32> to vector<2x32xf32>
    %259 = vector.extract_strided_slice %254 {offsets = [0, 64], sizes = [2, 32], strides = [1, 1]} : vector<2x96xf32> to vector<2x32xf32>
    %260 = arith.mulf %258, %243 : vector<2x32xf32>
    %261 = arith.mulf %257, %256 : vector<2x32xf32>
    %262 = arith.addf %260, %261 : vector<2x32xf32>
    %263 = math.tanh %262 : vector<2x32xf32>
    %264 = arith.mulf %259, %263 : vector<2x32xf32>
    %265 = vector.extract_strided_slice %167 {offsets = [10, 0], sizes = [2, 128], strides = [1, 1]} : vector<16x128xf32> to vector<2x128xf32>
    %cst_44 = arith.constant dense<0.000000e+00> : vector<2x128xf32>
    %266 = tpu.matmul %264, %163, %cst_44 {dimension_numbers = #tpu.dot_dimension_numbers<[1], [0], [0], [1], [0, 0, 1, 1], [], []>} : vector<2x32xf32>, vector<32x128xf32>, vector<2x128xf32> -> vector<2x128xf32>
    %267 = arith.addf %265, %266 : vector<2x128xf32>
    %268 = vector.extract_strided_slice %267 {offsets = [0, 0], sizes = [2, 96], strides = [1, 1]} : vector<2x128xf32> to vector<2x96xf32>
    %269 = arith.negf %268 : vector<2x96xf32>
    %270 = math.exp %269 : vector<2x96xf32>
    %cst_45 = arith.constant 1.000000e+00 : f32
    %271 = vector.broadcast %cst_45 : f32 to vector<2x96xf32>
    %272 = arith.addf %271, %270 : vector<2x96xf32>
    %273 = arith.divf %271, %272 : vector<2x96xf32>
    %274 = vector.extract_strided_slice %267 {offsets = [0, 96], sizes = [2, 32], strides = [1, 1]} : vector<2x128xf32> to vector<2x32xf32>
    %275 = math.tanh %274 : vector<2x32xf32>
    %276 = vector.extract_strided_slice %273 {offsets = [0, 0], sizes = [2, 32], strides = [1, 1]} : vector<2x96xf32> to vector<2x32xf32>
    %277 = vector.extract_strided_slice %273 {offsets = [0, 32], sizes = [2, 32], strides = [1, 1]} : vector<2x96xf32> to vector<2x32xf32>
    %278 = vector.extract_strided_slice %273 {offsets = [0, 64], sizes = [2, 32], strides = [1, 1]} : vector<2x96xf32> to vector<2x32xf32>
    %279 = arith.mulf %277, %262 : vector<2x32xf32>
    %280 = arith.mulf %276, %275 : vector<2x32xf32>
    %281 = arith.addf %279, %280 : vector<2x32xf32>
    %282 = math.tanh %281 : vector<2x32xf32>
    %283 = arith.mulf %278, %282 : vector<2x32xf32>
    %284 = vector.extract_strided_slice %167 {offsets = [12, 0], sizes = [2, 128], strides = [1, 1]} : vector<16x128xf32> to vector<2x128xf32>
    %cst_46 = arith.constant dense<0.000000e+00> : vector<2x128xf32>
    %285 = tpu.matmul %283, %163, %cst_46 {dimension_numbers = #tpu.dot_dimension_numbers<[1], [0], [0], [1], [0, 0, 1, 1], [], []>} : vector<2x32xf32>, vector<32x128xf32>, vector<2x128xf32> -> vector<2x128xf32>
    %286 = arith.addf %284, %285 : vector<2x128xf32>
    %287 = vector.extract_strided_slice %286 {offsets = [0, 0], sizes = [2, 96], strides = [1, 1]} : vector<2x128xf32> to vector<2x96xf32>
    %288 = arith.negf %287 : vector<2x96xf32>
    %289 = math.exp %288 : vector<2x96xf32>
    %cst_47 = arith.constant 1.000000e+00 : f32
    %290 = vector.broadcast %cst_47 : f32 to vector<2x96xf32>
    %291 = arith.addf %290, %289 : vector<2x96xf32>
    %292 = arith.divf %290, %291 : vector<2x96xf32>
    %293 = vector.extract_strided_slice %286 {offsets = [0, 96], sizes = [2, 32], strides = [1, 1]} : vector<2x128xf32> to vector<2x32xf32>
    %294 = math.tanh %293 : vector<2x32xf32>
    %295 = vector.extract_strided_slice %292 {offsets = [0, 0], sizes = [2, 32], strides = [1, 1]} : vector<2x96xf32> to vector<2x32xf32>
    %296 = vector.extract_strided_slice %292 {offsets = [0, 32], sizes = [2, 32], strides = [1, 1]} : vector<2x96xf32> to vector<2x32xf32>
    %297 = vector.extract_strided_slice %292 {offsets = [0, 64], sizes = [2, 32], strides = [1, 1]} : vector<2x96xf32> to vector<2x32xf32>
    %298 = arith.mulf %296, %281 : vector<2x32xf32>
    %299 = arith.mulf %295, %294 : vector<2x32xf32>
    %300 = arith.addf %298, %299 : vector<2x32xf32>
    %301 = math.tanh %300 : vector<2x32xf32>
    %302 = arith.mulf %297, %301 : vector<2x32xf32>
    %303 = vector.extract_strided_slice %167 {offsets = [14, 0], sizes = [2, 128], strides = [1, 1]} : vector<16x128xf32> to vector<2x128xf32>
    %cst_48 = arith.constant dense<0.000000e+00> : vector<2x128xf32>
    %304 = tpu.matmul %302, %163, %cst_48 {dimension_numbers = #tpu.dot_dimension_numbers<[1], [0], [0], [1], [0, 0, 1, 1], [], []>} : vector<2x32xf32>, vector<32x128xf32>, vector<2x128xf32> -> vector<2x128xf32>
    %305 = arith.addf %303, %304 : vector<2x128xf32>
    %306 = vector.extract_strided_slice %305 {offsets = [0, 0], sizes = [2, 96], strides = [1, 1]} : vector<2x128xf32> to vector<2x96xf32>
    %307 = arith.negf %306 : vector<2x96xf32>
    %308 = math.exp %307 : vector<2x96xf32>
    %cst_49 = arith.constant 1.000000e+00 : f32
    %309 = vector.broadcast %cst_49 : f32 to vector<2x96xf32>
    %310 = arith.addf %309, %308 : vector<2x96xf32>
    %311 = arith.divf %309, %310 : vector<2x96xf32>
    %312 = vector.extract_strided_slice %305 {offsets = [0, 96], sizes = [2, 32], strides = [1, 1]} : vector<2x128xf32> to vector<2x32xf32>
    %313 = math.tanh %312 : vector<2x32xf32>
    %314 = vector.extract_strided_slice %311 {offsets = [0, 0], sizes = [2, 32], strides = [1, 1]} : vector<2x96xf32> to vector<2x32xf32>
    %315 = vector.extract_strided_slice %311 {offsets = [0, 32], sizes = [2, 32], strides = [1, 1]} : vector<2x96xf32> to vector<2x32xf32>
    %316 = vector.extract_strided_slice %311 {offsets = [0, 64], sizes = [2, 32], strides = [1, 1]} : vector<2x96xf32> to vector<2x32xf32>
    %317 = arith.mulf %315, %300 : vector<2x32xf32>
    %318 = arith.mulf %314, %313 : vector<2x32xf32>
    %319 = arith.addf %317, %318 : vector<2x32xf32>
    %320 = math.tanh %319 : vector<2x32xf32>
    %321 = arith.mulf %316, %320 : vector<2x32xf32>
    %322 = tpu.concatenate %188, %207, %226, %245, %264, %283, %302, %321 in 1 : vector<2x32xf32>, vector<2x32xf32>, vector<2x32xf32>, vector<2x32xf32>, vector<2x32xf32>, vector<2x32xf32>, vector<2x32xf32>, vector<2x32xf32> -> vector<2x256xf32>
    %323 = vector.shape_cast %322 : vector<2x256xf32> to vector<2x64x4xf32>
    %cst_50 = arith.constant dense<0xFF800000> : vector<2x64xf32>
    %324 = vector.multi_reduction <maximumf>, %323, %cst_50 [2] : vector<2x64x4xf32> to vector<2x64xf32>
    %c0_51 = arith.constant 0 : index
    %c0_52 = arith.constant 0 : index
    %325 = vector.load %arg8[%c0_51, %c0_52] : memref<64x5xf32, #tpu.memory_space<vmem>>, vector<64x5xf32>
    %cst_53 = arith.constant dense<0.000000e+00> : vector<2x5xf32>
    %326 = tpu.matmul %324, %325, %cst_53 {dimension_numbers = #tpu.dot_dimension_numbers<[1], [0], [0], [1], [0, 0, 1, 1], [], []>} : vector<2x64xf32>, vector<64x5xf32>, vector<2x5xf32> -> vector<2x5xf32>
    %c0_54 = arith.constant 0 : index
    %c0_55 = arith.constant 0 : index
    %327 = vector.load %arg9[%c0_54, %c0_55] : memref<1x5xf32, #tpu.memory_space<vmem>>, vector<1x5xf32>
    %328 = vector.broadcast %327 : vector<1x5xf32> to vector<2x5xf32>
    %329 = arith.addf %326, %328 : vector<2x5xf32>
    %c0_56 = arith.constant 0 : index
    %c0_57 = arith.constant 0 : index
    %330 = vector.load %arg10[%c0_56, %c0_57] : memref<2x5xf32, #tpu.memory_space<vmem>>, vector<2x5xf32>
    tpu.vector_store %arg10[%c0_56, %c0_57], %329 {strides = array<i32>} : memref<2x5xf32, #tpu.memory_space<vmem>>, vector<2x5xf32>,
    return
  }
  func.func @transform_0(%arg0: i32) -> (i32, i32) {
    %c0_i32 = arith.constant 0 : i32
    %c0_i32_0 = arith.constant 0 : i32
    %c0_i32_1 = arith.constant 0 : i32
    return %c0_i32, %c0_i32_0 : i32, i32
  }
  func.func @transform_1(%arg0: i32) -> (i32, i32) {
    %c0_i32 = arith.constant 0 : i32
    %c0_i32_0 = arith.constant 0 : i32
    %c0_i32_1 = arith.constant 0 : i32
    return %c0_i32, %c0_i32_0 : i32, i32
  }
  func.func @transform_2(%arg0: i32) -> (i32, i32) {
    %c0_i32 = arith.constant 0 : i32
    %c0_i32_0 = arith.constant 0 : i32
    %c0_i32_1 = arith.constant 0 : i32
    return %c0_i32, %c0_i32_0 : i32, i32
  }
  func.func @transform_3(%arg0: i32) -> (i32, i32) {
    %c0_i32 = arith.constant 0 : i32
    %c0_i32_0 = arith.constant 0 : i32
    %c0_i32_1 = arith.constant 0 : i32
    return %c0_i32, %c0_i32_0 : i32, i32
  }
  func.func @transform_4(%arg0: i32) -> (i32, i32) {
    %c0_i32 = arith.constant 0 : i32
    %c0_i32_0 = arith.constant 0 : i32
    %c0_i32_1 = arith.constant 0 : i32
    return %c0_i32, %c0_i32_0 : i32, i32
  }
  func.func @transform_5(%arg0: i32) -> (i32, i32) {
    %c0_i32 = arith.constant 0 : i32
    %c0_i32_0 = arith.constant 0 : i32
    %c0_i32_1 = arith.constant 0 : i32
    return %c0_i32, %c0_i32_0 : i32, i32
  }
  func.func @transform_6(%arg0: i32) -> (i32, i32) {
    %c0_i32 = arith.constant 0 : i32
    %c0_i32_0 = arith.constant 0 : i32
    %c0_i32_1 = arith.constant 0 : i32
    return %c0_i32, %c0_i32_0 : i32, i32
  }
  func.func @transform_7(%arg0: i32) -> (i32, i32) {
    %c0_i32 = arith.constant 0 : i32
    %c0_i32_0 = arith.constant 0 : i32
    %c0_i32_1 = arith.constant 0 : i32
    return %c0_i32, %c0_i32_0 : i32, i32
  }
  func.func @transform_8(%arg0: i32) -> (i32, i32) {
    %c0_i32 = arith.constant 0 : i32
    %c0_i32_0 = arith.constant 0 : i32
    %c0_i32_1 = arith.constant 0 : i32
    return %c0_i32, %c0_i32_0 : i32, i32
  }
  func.func @transform_9(%arg0: i32) -> (i32, i32) {
    %c0_i32 = arith.constant 0 : i32
    %c0_i32_0 = arith.constant 0 : i32
    %c0_i32_1 = arith.constant 0 : i32
    return %c0_i32, %c0_i32_0 : i32, i32
  }
}

</mosaic_0001>

<llo_original>
// kernel: lstm_model_forward.1
$region0: #{lstm_model_forward.1}
  #allocation0 [shape = 'u32[]', space=smem, size = 0x4, offset = 0x4, fixed_abs, tag = 'smem constant byte address 0x4 - core index']
  #allocation1 [shape = 'u32[144,128]{1,0:T(1,128)}', space=vmem, size = 0x12000, scoped, tag = 'internal scratch']
  %s0 = inlined_call_operand.vmem [shape: f32[16,16], index: 0, kind: input, shape index: {}]
  %s1 = inlined_call_operand.vmem [shape: f32[16,128], index: 1, kind: input, shape index: {}]
  %s2 = inlined_call_operand.vmem [shape: f32[32,128], index: 2, kind: input, shape index: {}]
  %s3 = inlined_call_operand.vmem [shape: f32[1,128], index: 3, kind: input, shape index: {}]
  %s4 = inlined_call_operand.vmem [shape: f32[32,128], index: 4, kind: input, shape index: {}]
  %s5 = inlined_call_operand.vmem [shape: f32[32,128], index: 5, kind: input, shape index: {}]
  %s6 = inlined_call_operand.vmem [shape: f32[1,128], index: 6, kind: input, shape index: {}]
  %s7 = inlined_call_operand.vmem [shape: f32[64,5], index: 7, kind: input, shape index: {}]
  %s8 = inlined_call_operand.vmem [shape: f32[1,5], index: 8, kind: input, shape index: {}]
  %s9 = inlined_call_operand.hbm [shape: f32[2,5], index: 9, kind: output, shape index: {}]
  %s10 = sld [smem:[#allocation0]]
  $region46: #{lstm_model_forward.1} parent=0
    _
  %s12 = ssub.s32 1, %s10
  %s13 = scalar_select 0, %s12, %s10
  $region1: #{lstm_model_forward.1} parent=0
    #allocation2 [shape = 'u8[1024]{0}', space=vmem, size = 0x400, scoped, tag = 'output window, operand 0, single buffered']
    #allocation3 [shape = 's32[1]{0}', space=sflag, size = 0x4, scoped, tag = 'scoped memory for lstm_model_forward.1']
    %14 = vsyncpa [#allocation3], 0
    // Predicated region
    $region2: #{lstm_model_forward.1} parent=1 // pred_check
      _
    $region3: #{lstm_model_forward.1} parent=1 // pred_check_branch
      %16 = sbr.rel (0) target = $region5
    $region4: #{lstm_model_forward.1} parent=1 // pred_region
      _
    $region5: #{lstm_model_forward.1} parent=1 // pred_fallthru
      _
    // Predicated region
    $region6: #{lstm_model_forward.1} parent=1 // pred_check
      _
    $region7: #{lstm_model_forward.1} parent=1 // pred_check_branch
      %18 = sbr.rel (0) target = $region9
    $region8: #{lstm_model_forward.1} parent=1 // pred_region
      _
    $region9: #{lstm_model_forward.1} parent=1 // pred_fallthru
      _
    // Predicated region
    $region10: #{lstm_model_forward.1} parent=1 // pred_check
      _
    $region11: #{lstm_model_forward.1} parent=1 // pred_check_branch
      %20 = sbr.rel (0) target = $region13
    $region12: #{lstm_model_forward.1} parent=1 // pred_region
      _
    $region13: #{lstm_model_forward.1} parent=1 // pred_fallthru
      _
    // Predicated region
    $region14: #{lstm_model_forward.1} parent=1 // pred_check
      _
    $region15: #{lstm_model_forward.1} parent=1 // pred_check_branch
      %22 = sbr.rel (0) target = $region17
    $region16: #{lstm_model_forward.1} parent=1 // pred_region
      _
    $region17: #{lstm_model_forward.1} parent=1 // pred_fallthru
      _
    // Predicated region
    $region18: #{lstm_model_forward.1} parent=1 // pred_check
      _
    $region19: #{lstm_model_forward.1} parent=1 // pred_check_branch
      %24 = sbr.rel (0) target = $region21
    $region20: #{lstm_model_forward.1} parent=1 // pred_region
      _
    $region21: #{lstm_model_forward.1} parent=1 // pred_fallthru
      _
    // Predicated region
    $region22: #{lstm_model_forward.1} parent=1 // pred_check
      _
    $region23: #{lstm_model_forward.1} parent=1 // pred_check_branch
      %26 = sbr.rel (0) target = $region25
    $region24: #{lstm_model_forward.1} parent=1 // pred_region
      _
    $region25: #{lstm_model_forward.1} parent=1 // pred_fallthru
      _
    // Predicated region
    $region26: #{lstm_model_forward.1} parent=1 // pred_check
      _
    $region27: #{lstm_model_forward.1} parent=1 // pred_check_branch
      %28 = sbr.rel (0) target = $region29
    $region28: #{lstm_model_forward.1} parent=1 // pred_region
      _
    $region29: #{lstm_model_forward.1} parent=1 // pred_fallthru
      _
    // Predicated region
    $region30: #{lstm_model_forward.1} parent=1 // pred_check
      _
    $region31: #{lstm_model_forward.1} parent=1 // pred_check_branch
      %30 = sbr.rel (0) target = $region33
    $region32: #{lstm_model_forward.1} parent=1 // pred_region
      _
    $region33: #{lstm_model_forward.1} parent=1 // pred_fallthru
      _
    // Predicated region
    $region34: #{lstm_model_forward.1} parent=1 // pred_check
      _
    $region35: #{lstm_model_forward.1} parent=1 // pred_check_branch
      %32 = sbr.rel (0) target = $region37
    $region36: #{lstm_model_forward.1} parent=1 // pred_region
      _
    $region37: #{lstm_model_forward.1} parent=1 // pred_fallthru
      _
    %v33 = vld [vmem:[%s0] sm:$0xff]
    %v34 = vld [vmem:[%s0 + $0x8] sm:$0xff]
    %v35 = vld [vmem:[%s1] sm:$0xff]
    %v36 = vld [vmem:[%s1 + $0x8] sm:$0xff]
    %v37 = vld [vmem:[%s2] sm:$0xff]
    %v38 = vld [vmem:[%s2 + $0x8] sm:$0xff]
    %v39 = vld [vmem:[%s2 + $0x10] sm:$0xff]
    %v40 = vld [vmem:[%s2 + $0x18] sm:$0xff]
    %v41 = vld [vmem:[%s3] sm:$0x1]
    %v43 = vlaneseq
    %v44 = vshrl.u32 %v43, 7
    %v45 = vsub.s32 0, %v44
    %v46 = vrot.slane %v41, %v45
    %vm48 = vcmask 130048
    %v50 = vsel %vm48, %v33, 0
    %v53 = vsel %vm48, %v34, 0
    %55 = vmatprep.subr.mxu0 0.0
    %56 = vmatpush1.msra.mxu0 %v35
    %57 = vmatprep.subr.mxu0 0.0
    %58 = vmatpush1.msra.mxu0 %v36
    %59 = vmatprep.subr.mxu0 0.0
    %60 = vmatpush1.msra.mxu0 0.0
    %61 = vmatprep.subr.mxu0 0.0
    %62 = vmatpush1.msra.mxu0 0.0
    %63 = vmatprep.subr.mxu0 0.0
    %64 = vmatpush1.msra.mxu0 0.0
    %65 = vmatprep.subr.mxu0 0.0
    %66 = vmatpush1.msra.mxu0 0.0
    %67 = vmatprep.subr.mxu0 0.0
    %68 = vmatpush1.msra.mxu0 0.0
    %69 = vmatprep.subr.mxu0 0.0
    %70 = vmatpush1.msra.mxu0 0.0
    %71 = vmatprep.subr.mxu0 0.0
    %72 = vmatpush1.msra.mxu0 0.0
    %73 = vmatprep.subr.mxu0 0.0
    %74 = vmatpush1.msra.mxu0 0.0
    %75 = vmatprep.subr.mxu0 0.0
    %76 = vmatpush1.msra.mxu0 0.0
    %77 = vmatprep.subr.mxu0 0.0
    %78 = vmatpush1.msra.mxu0 0.0
    %79 = vmatprep.subr.mxu0 0.0
    %80 = vmatpush1.msra.mxu0 0.0
    %81 = vmatprep.subr.mxu0 0.0
    %82 = vmatpush1.msra.mxu0 0.0
    %83 = vmatprep.subr.mxu0 0.0
    %84 = vmatpush1.msra.mxu0 0.0
    %85 = vmatprep.subr.mxu0 0.0
    %86 = vmatpush1.msra.mxu0 0.0
    %87 = vmatprep.subr.mxu0 0.0
    %88 = vmatpush1.msra.mxu0 0.0
    %89 = vmatprep.subr.mxu0 0.0
    %90 = vmatpush1.msra.mxu0 0.0
    %91 = vmatprep.subr.mxu0 0.0
    %92 = vmatpush1.msra.mxu0 0.0
    %93 = vmatprep.subr.mxu0 0.0
    %94 = vmatpush1.msra.mxu0 0.0
    %95 = vmatprep.subr.mxu0 0.0
    %96 = vmatpush1.msra.mxu0 0.0
    %97 = vmatprep.subr.mxu0 0.0
    %98 = vmatpush1.msra.mxu0 0.0
    %99 = vmatprep.subr.mxu0 0.0
    %100 = vmatpush1.msra.mxu0 0.0
    %101 = vmatprep.subr.mxu0 0.0
    %102 = vmatpush1.msra.mxu0 0.0
    %103 = vmatprep.subr.mxu0 0.0
    %104 = vmatpush1.msra.mxu0 0.0
    %105 = vmatprep.subr.mxu0 0.0
    %106 = vmatpush1.msra.mxu0 0.0
    %107 = vmatprep.subr.mxu0 0.0
    %108 = vmatpush1.msra.mxu0 0.0
    %109 = vmatprep.subr.mxu0 0.0
    %110 = vmatpush1.msra.mxu0 0.0
    %111 = vmatprep.subr.mxu0 0.0
    %112 = vmatpush1.msra.mxu0 0.0
    %113 = vmatprep.subr.mxu0 0.0
    %114 = vmatpush1.msra.mxu0 0.0
    %115 = vmatprep.subr.mxu0 0.0
    %116 = vmatpush1.msra.mxu0 0.0
    %117 = vmatprep.subr.mxu0 0.0
    %118 = vmatpush1.msra.mxu0 0.0
    %119 = vmatprep.mubr.f32.mxu0 0.0
    %120 = vmatmul.mubr.f32.gmra.mrb[0].mxu0 %v50
    %v121 = vpop.f32.mrb[0].mxu0
    %v122 = vadd.f32 %v46, %v121
    %v123 = vpop.f32.mrb[0].mxu0
    %124 = vmatprep.mubr.f32.mxu0 0.0
    %125 = vmatmul.mubr.f32.gmra.mrb[0].mxu0 %v53
    %v126 = vpop.f32.mrb[0].mxu0
    %v127 = vadd.f32 %v46, %v126
    %v128 = vpop.f32.mrb[0].mxu0
    %129 = vdwg.mxu0
    %vm130 = vcmask 261120
    %v132 = vsel %vm130, 0.0, 0
    %134 = vmatprep.subr.mxu0 0.0
    %135 = vmatpush1.msra.mxu0 %v37
    %136 = vmatprep.subr.mxu0 0.0
    %137 = vmatpush1.msra.mxu0 %v38
    %138 = vmatprep.subr.mxu0 0.0
    %139 = vmatpush1.msra.mxu0 %v39
    %140 = vmatprep.subr.mxu0 0.0
    %141 = vmatpush1.msra.mxu0 %v40
    %142 = vmatprep.subr.mxu0 0.0
    %143 = vmatpush1.msra.mxu0 0.0
    %144 = vmatprep.subr.mxu0 0.0
    %145 = vmatpush1.msra.mxu0 0.0
    %146 = vmatprep.subr.mxu0 0.0
    %147 = vmatpush1.msra.mxu0 0.0
    %148 = vmatprep.subr.mxu0 0.0
    %149 = vmatpush1.msra.mxu0 0.0
    %150 = vmatprep.subr.mxu0 0.0
    %151 = vmatpush1.msra.mxu0 0.0
    %152 = vmatprep.subr.mxu0 0.0
    %153 = vmatpush1.msra.mxu0 0.0
    %154 = vmatprep.subr.mxu0 0.0
    %155 = vmatpush1.msra.mxu0 0.0
    %156 = vmatprep.subr.mxu0 0.0
    %157 = vmatpush1.msra.mxu0 0.0
    %158 = vmatprep.subr.mxu0 0.0
    %159 = vmatpush1.msra.mxu0 0.0
    %160 = vmatprep.subr.mxu0 0.0
    %161 = vmatpush1.msra.mxu0 0.0
    %162 = vmatprep.subr.mxu0 0.0
    %163 = vmatpush1.msra.mxu0 0.0
    %164 = vmatprep.subr.mxu0 0.0
    %165 = vmatpush1.msra.mxu0 0.0
    %166 = vmatprep.subr.mxu0 0.0
    %167 = vmatpush1.msra.mxu0 0.0
    %168 = vmatprep.subr.mxu0 0.0
    %169 = vmatpush1.msra.mxu0 0.0
    %170 = vmatprep.subr.mxu0 0.0
    %171 = vmatpush1.msra.mxu0 0.0
    %172 = vmatprep.subr.mxu0 0.0
    %173 = vmatpush1.msra.mxu0 0.0
    %174 = vmatprep.subr.mxu0 0.0
    %175 = vmatpush1.msra.mxu0 0.0
    %176 = vmatprep.subr.mxu0 0.0
    %177 = vmatpush1.msra.mxu0 0.0
    %178 = vmatprep.subr.mxu0 0.0
    %179 = vmatpush1.msra.mxu0 0.0
    %180 = vmatprep.subr.mxu0 0.0
    %181 = vmatpush1.msra.mxu0 0.0
    %182 = vmatprep.subr.mxu0 0.0
    %183 = vmatpush1.msra.mxu0 0.0
    %184 = vmatprep.subr.mxu0 0.0
    %185 = vmatpush1.msra.mxu0 0.0
    %186 = vmatprep.subr.mxu0 0.0
    %187 = vmatpush1.msra.mxu0 0.0
    %188 = vmatprep.subr.mxu0 0.0
    %189 = vmatpush1.msra.mxu0 0.0
    %190 = vmatprep.subr.mxu0 0.0
    %191 = vmatpush1.msra.mxu0 0.0
    %192 = vmatprep.subr.mxu0 0.0
    %193 = vmatpush1.msra.mxu0 0.0
    %194 = vmatprep.subr.mxu0 0.0
    %195 = vmatpush1.msra.mxu0 0.0
    %196 = vmatprep.subr.mxu0 0.0
    %197 = vmatpush1.msra.mxu0 0.0
    %198 = vmatprep.mubr.f32.mxu0 0.0
    %199 = vmatmul.mubr.f32.gmra.mrb[0].mxu0 %v132
    %v200 = vpop.f32.mrb[0].mxu0
    %v201 = vadd.f32 0.0, %v200
    %v202 = vpop.f32.mrb[0].mxu0
    %203 = vdwg.mxu0
    %v204 = vadd.f32 %v122, %v201
    %v205 = vxor.u32 %v204, 2147483648
    %v206 = vmul.f32 %v205, 1.442695
    %v207 = vpow.pop %v206
    %v208 = vadd.f32 %v207, 1.0
    %v209 = vrcp.pop %v208
    %v210 = vmul.f32 1.0, %v209
    %v211 = vtanh.pop %v204
    %v212 = vmul.f32 %v210, 0.0
    %214 = vrot.lane.b32.xlu0 %v211, 32
    %v215 = vpop.permute.xlu0 %214
    %v217 = vmul.f32 %v210, %v215
    %219 = vrot.lane.b32.xlu0 %v217, 32
    %v220 = vpop.permute.xlu0 %219
    %v222 = vadd.f32 %v212, %v220
    %v223 = vtanh.pop %v222
    %225 = vrot.lane.b32.xlu0 %v223, 32
    %v226 = vpop.permute.xlu0 %225
    %v228 = vmul.f32 %v210, %v226
    %230 = vrot.lane.b32.xlu0 %v228, 64
    %v231 = vpop.permute.xlu0 %230
    %v232 = vsel %vm130, %v231, 0
    %234 = vmatprep.subr.mxu0 0.0
    %235 = vmatpush1.msra.mxu0 %v37
    %236 = vmatprep.subr.mxu0 0.0
    %237 = vmatpush1.msra.mxu0 %v38
    %238 = vmatprep.subr.mxu0 0.0
    %239 = vmatpush1.msra.mxu0 %v39
    %240 = vmatprep.subr.mxu0 0.0
    %241 = vmatpush1.msra.mxu0 %v40
    %242 = vmatprep.subr.mxu0 0.0
    %243 = vmatpush1.msra.mxu0 0.0
    %244 = vmatprep.subr.mxu0 0.0
    %245 = vmatpush1.msra.mxu0 0.0
    %246 = vmatprep.subr.mxu0 0.0
    %247 = vmatpush1.msra.mxu0 0.0
    %248 = vmatprep.subr.mxu0 0.0
    %249 = vmatpush1.msra.mxu0 0.0
    %250 = vmatprep.subr.mxu0 0.0
    %251 = vmatpush1.msra.mxu0 0.0
    %252 = vmatprep.subr.mxu0 0.0
    %253 = vmatpush1.msra.mxu0 0.0
    %254 = vmatprep.subr.mxu0 0.0
    %255 = vmatpush1.msra.mxu0 0.0
    %256 = vmatprep.subr.mxu0 0.0
    %257 = vmatpush1.msra.mxu0 0.0
    %258 = vmatprep.subr.mxu0 0.0
    %259 = vmatpush1.msra.mxu0 0.0
    %260 = vmatprep.subr.mxu0 0.0
    %261 = vmatpush1.msra.mxu0 0.0
    %262 = vmatprep.subr.mxu0 0.0
    %263 = vmatpush1.msra.mxu0 0.0
    %264 = vmatprep.subr.mxu0 0.0
    %265 = vmatpush1.msra.mxu0 0.0
    %266 = vmatprep.subr.mxu0 0.0
    %267 = vmatpush1.msra.mxu0 0.0
    %268 = vmatprep.subr.mxu0 0.0
    %269 = vmatpush1.msra.mxu0 0.0
    %270 = vmatprep.subr.mxu0 0.0
    %271 = vmatpush1.msra.mxu0 0.0
    %272 = vmatprep.subr.mxu0 0.0
    %273 = vmatpush1.msra.mxu0 0.0
    %274 = vmatprep.subr.mxu0 0.0
    %275 = vmatpush1.msra.mxu0 0.0
    %276 = vmatprep.subr.mxu0 0.0
    %277 = vmatpush1.msra.mxu0 0.0
    %278 = vmatprep.subr.mxu0 0.0
    %279 = vmatpush1.msra.mxu0 0.0
    %280 = vmatprep.subr.mxu0 0.0
    %281 = vmatpush1.msra.mxu0 0.0
    %282 = vmatprep.subr.mxu0 0.0
    %283 = vmatpush1.msra.mxu0 0.0
    %284 = vmatprep.subr.mxu0 0.0
    %285 = vmatpush1.msra.mxu0 0.0
    %286 = vmatprep.subr.mxu0 0.0
    %287 = vmatpush1.msra.mxu0 0.0
    %288 = vmatprep.subr.mxu0 0.0
    %289 = vmatpush1.msra.mxu0 0.0
    %290 = vmatprep.subr.mxu0 0.0
    %291 = vmatpush1.msra.mxu0 0.0
    %292 = vmatprep.subr.mxu0 0.0
    %293 = vmatpush1.msra.mxu0 0.0
    %294 = vmatprep.subr.mxu0 0.0
    %295 = vmatpush1.msra.mxu0 0.0
    %296 = vmatprep.subr.mxu0 0.0
    %297 = vmatpush1.msra.mxu0 0.0
    %298 = vmatprep.mubr.f32.mxu0 0.0
    %299 = vmatmul.mubr.f32.gmra.mrb[0].mxu0 %v232
    %v300 = vpop.f32.mrb[0].mxu0
    %v301 = vadd.f32 0.0, %v300
    %v302 = vpop.f32.mrb[0].mxu0
    %303 = vdwg.mxu0
    %v305 = vrot.slane %v301, 6
    %v307 = vadd.f32 %v122, %v305
    %v308 = vxor.u32 %v307, 2147483648
    %v309 = vmul.f32 %v308, 1.442695
    %v310 = vpow.pop %v309
    %v311 = vadd.f32 %v310, 1.0
    %v312 = vrcp.pop %v311
    %v313 = vmul.f32 1.0, %v312
    %v314 = vtanh.pop %v307
    %v316 = vrot.slane %v222, 6
    %v318 = vmul.f32 %v313, %v316
    %320 = vrot.lane.b32.xlu0 %v314, 32
    %v321 = vpop.permute.xlu0 %320
    %v323 = vmul.f32 %v313, %v321
    %325 = vrot.lane.b32.xlu0 %v323, 32
    %v326 = vpop.permute.xlu0 %325
    %v328 = vadd.f32 %v318, %v326
    %v329 = vtanh.pop %v328
    %331 = vrot.lane.b32.xlu0 %v329, 32
    %v332 = vpop.permute.xlu0 %331
    %v334 = vmul.f32 %v313, %v332
    %v336 = vrot.slane %v334, 2
    %337 = vrot.lane.b32.xlu0 %v336, 64
    %v338 = vpop.permute.xlu0 %337
    %v339 = vsel %vm130, %v338, 0
    %341 = vmatprep.subr.mxu0 0.0
    %342 = vmatpush1.msra.mxu0 %v37
    %343 = vmatprep.subr.mxu0 0.0
    %344 = vmatpush1.msra.mxu0 %v38
    %345 = vmatprep.subr.mxu0 0.0
    %346 = vmatpush1.msra.mxu0 %v39
    %347 = vmatprep.subr.mxu0 0.0
    %348 = vmatpush1.msra.mxu0 %v40
    %349 = vmatprep.subr.mxu0 0.0
    %350 = vmatpush1.msra.mxu0 0.0
    %351 = vmatprep.subr.mxu0 0.0
    %352 = vmatpush1.msra.mxu0 0.0
    %353 = vmatprep.subr.mxu0 0.0
    %354 = vmatpush1.msra.mxu0 0.0
    %355 = vmatprep.subr.mxu0 0.0
    %356 = vmatpush1.msra.mxu0 0.0
    %357 = vmatprep.subr.mxu0 0.0
    %358 = vmatpush1.msra.mxu0 0.0
    %359 = vmatprep.subr.mxu0 0.0
    %360 = vmatpush1.msra.mxu0 0.0
    %361 = vmatprep.subr.mxu0 0.0
    %362 = vmatpush1.msra.mxu0 0.0
    %363 = vmatprep.subr.mxu0 0.0
    %364 = vmatpush1.msra.mxu0 0.0
    %365 = vmatprep.subr.mxu0 0.0
    %366 = vmatpush1.msra.mxu0 0.0
    %367 = vmatprep.subr.mxu0 0.0
    %368 = vmatpush1.msra.mxu0 0.0
    %369 = vmatprep.subr.mxu0 0.0
    %370 = vmatpush1.msra.mxu0 0.0
    %371 = vmatprep.subr.mxu0 0.0
    %372 = vmatpush1.msra.mxu0 0.0
    %373 = vmatprep.subr.mxu0 0.0
    %374 = vmatpush1.msra.mxu0 0.0
    %375 = vmatprep.subr.mxu0 0.0
    %376 = vmatpush1.msra.mxu0 0.0
    %377 = vmatprep.subr.mxu0 0.0
    %378 = vmatpush1.msra.mxu0 0.0
    %379 = vmatprep.subr.mxu0 0.0
    %380 = vmatpush1.msra.mxu0 0.0
    %381 = vmatprep.subr.mxu0 0.0
    %382 = vmatpush1.msra.mxu0 0.0
    %383 = vmatprep.subr.mxu0 0.0
    %384 = vmatpush1.msra.mxu0 0.0
    %385 = vmatprep.subr.mxu0 0.0
    %386 = vmatpush1.msra.mxu0 0.0
    %387 = vmatprep.subr.mxu0 0.0
    %388 = vmatpush1.msra.mxu0 0.0
    %389 = vmatprep.subr.mxu0 0.0
    %390 = vmatpush1.msra.mxu0 0.0
    %391 = vmatprep.subr.mxu0 0.0
    %392 = vmatpush1.msra.mxu0 0.0
    %393 = vmatprep.subr.mxu0 0.0
    %394 = vmatpush1.msra.mxu0 0.0
    %395 = vmatprep.subr.mxu0 0.0
    %396 = vmatpush1.msra.mxu0 0.0
    %397 = vmatprep.subr.mxu0 0.0
    %398 = vmatpush1.msra.mxu0 0.0
    %399 = vmatprep.subr.mxu0 0.0
    %400 = vmatpush1.msra.mxu0 0.0
    %401 = vmatprep.subr.mxu0 0.0
    %402 = vmatpush1.msra.mxu0 0.0
    %403 = vmatprep.subr.mxu0 0.0
    %404 = vmatpush1.msra.mxu0 0.0
    %405 = vmatprep.mubr.f32.mxu0 0.0
    %406 = vmatmul.mubr.f32.gmra.mrb[0].mxu0 %v339
    %v407 = vpop.f32.mrb[0].mxu0
    %v408 = vadd.f32 0.0, %v407
    %v409 = vpop.f32.mrb[0].mxu0
    %410 = vdwg.mxu0
    %v412 = vrot.slane %v408, 4
    %v414 = vadd.f32 %v122, %v412
    %v415 = vxor.u32 %v414, 2147483648
    %v416 = vmul.f32 %v415, 1.442695
    %v417 = vpow.pop %v416
    %v418 = vadd.f32 %v417, 1.0
    %v419 = vrcp.pop %v418
    %v420 = vmul.f32 1.0, %v419
    %v421 = vtanh.pop %v414
    %v423 = vrot.slane %v328, 6
    %v425 = vmul.f32 %v420, %v423
    %427 = vrot.lane.b32.xlu0 %v421, 32
    %v428 = vpop.permute.xlu0 %427
    %v430 = vmul.f32 %v420, %v428
    %432 = vrot.lane.b32.xlu0 %v430, 32
    %v433 = vpop.permute.xlu0 %432
    %v435 = vadd.f32 %v425, %v433
    %v436 = vtanh.pop %v435
    %438 = vrot.lane.b32.xlu0 %v436, 32
    %v439 = vpop.permute.xlu0 %438
    %v441 = vmul.f32 %v420, %v439
    %v443 = vrot.slane %v441, 4
    %444 = vrot.lane.b32.xlu0 %v443, 64
    %v445 = vpop.permute.xlu0 %444
    %v446 = vsel %vm130, %v445, 0
    %448 = vmatprep.subr.mxu0 0.0
    %449 = vmatpush1.msra.mxu0 %v37
    %450 = vmatprep.subr.mxu0 0.0
    %451 = vmatpush1.msra.mxu0 %v38
    %452 = vmatprep.subr.mxu0 0.0
    %453 = vmatpush1.msra.mxu0 %v39
    %454 = vmatprep.subr.mxu0 0.0
    %455 = vmatpush1.msra.mxu0 %v40
    %456 = vmatprep.subr.mxu0 0.0
    %457 = vmatpush1.msra.mxu0 0.0
    %458 = vmatprep.subr.mxu0 0.0
    %459 = vmatpush1.msra.mxu0 0.0
    %460 = vmatprep.subr.mxu0 0.0
    %461 = vmatpush1.msra.mxu0 0.0
    %462 = vmatprep.subr.mxu0 0.0
    %463 = vmatpush1.msra.mxu0 0.0
    %464 = vmatprep.subr.mxu0 0.0
    %465 = vmatpush1.msra.mxu0 0.0
    %466 = vmatprep.subr.mxu0 0.0
    %467 = vmatpush1.msra.mxu0 0.0
    %468 = vmatprep.subr.mxu0 0.0
    %469 = vmatpush1.msra.mxu0 0.0
    %470 = vmatprep.subr.mxu0 0.0
    %471 = vmatpush1.msra.mxu0 0.0
    %472 = vmatprep.subr.mxu0 0.0
    %473 = vmatpush1.msra.mxu0 0.0
    %474 = vmatprep.subr.mxu0 0.0
    %475 = vmatpush1.msra.mxu0 0.0
    %476 = vmatprep.subr.mxu0 0.0
    %477 = vmatpush1.msra.mxu0 0.0
    %478 = vmatprep.subr.mxu0 0.0
    %479 = vmatpush1.msra.mxu0 0.0
    %480 = vmatprep.subr.mxu0 0.0
    %481 = vmatpush1.msra.mxu0 0.0
    %482 = vmatprep.subr.mxu0 0.0
    %483 = vmatpush1.msra.mxu0 0.0
    %484 = vmatprep.subr.mxu0 0.0
    %485 = vmatpush1.msra.mxu0 0.0
    %486 = vmatprep.subr.mxu0 0.0
    %487 = vmatpush1.msra.mxu0 0.0
    %488 = vmatprep.subr.mxu0 0.0
    %489 = vmatpush1.msra.mxu0 0.0
    %490 = vmatprep.subr.mxu0 0.0
    %491 = vmatpush1.msra.mxu0 0.0
    %492 = vmatprep.subr.mxu0 0.0
    %493 = vmatpush1.msra.mxu0 0.0
    %494 = vmatprep.subr.mxu0 0.0
    %495 = vmatpush1.msra.mxu0 0.0
    %496 = vmatprep.subr.mxu0 0.0
    %497 = vmatpush1.msra.mxu0 0.0
    %498 = vmatprep.subr.mxu0 0.0
    %499 = vmatpush1.msra.mxu0 0.0
    %500 = vmatprep.subr.mxu0 0.0
    %501 = vmatpush1.msra.mxu0 0.0
    %502 = vmatprep.subr.mxu0 0.0
    %503 = vmatpush1.msra.mxu0 0.0
    %504 = vmatprep.subr.mxu0 0.0
    %505 = vmatpush1.msra.mxu0 0.0
    %506 = vmatprep.subr.mxu0 0.0
    %507 = vmatpush1.msra.mxu0 0.0
    %508 = vmatprep.subr.mxu0 0.0
    %509 = vmatpush1.msra.mxu0 0.0
    %510 = vmatprep.subr.mxu0 0.0
    %511 = vmatpush1.msra.mxu0 0.0
    %512 = vmatprep.mubr.f32.mxu0 0.0
    %513 = vmatmul.mubr.f32.gmra.mrb[0].mxu0 %v446
    %v514 = vpop.f32.mrb[0].mxu0
    %v515 = vadd.f32 0.0, %v514
    %v516 = vpop.f32.mrb[0].mxu0
    %517 = vdwg.mxu0
    %v519 = vrot.slane %v515, 2
    %v521 = vadd.f32 %v122, %v519
    %v522 = vxor.u32 %v521, 2147483648
    %v523 = vmul.f32 %v522, 1.442695
    %v524 = vpow.pop %v523
    %v525 = vadd.f32 %v524, 1.0
    %v526 = vrcp.pop %v525
    %v527 = vmul.f32 1.0, %v526
    %v528 = vtanh.pop %v521
    %v530 = vrot.slane %v435, 6
    %v532 = vmul.f32 %v527, %v530
    %534 = vrot.lane.b32.xlu0 %v528, 32
    %v535 = vpop.permute.xlu0 %534
    %v537 = vmul.f32 %v527, %v535
    %539 = vrot.lane.b32.xlu0 %v537, 32
    %v540 = vpop.permute.xlu0 %539
    %v542 = vadd.f32 %v532, %v540
    %v543 = vtanh.pop %v542
    %545 = vrot.lane.b32.xlu0 %v543, 32
    %v546 = vpop.permute.xlu0 %545
    %v548 = vmul.f32 %v527, %v546
    %v550 = vrot.slane %v548, 6
    %551 = vrot.lane.b32.xlu0 %v550, 64
    %v552 = vpop.permute.xlu0 %551
    %v553 = vsel %vm130, %v552, 0
    %555 = vmatprep.subr.mxu0 0.0
    %556 = vmatpush1.msra.mxu0 %v37
    %557 = vmatprep.subr.mxu0 0.0
    %558 = vmatpush1.msra.mxu0 %v38
    %559 = vmatprep.subr.mxu0 0.0
    %560 = vmatpush1.msra.mxu0 %v39
    %561 = vmatprep.subr.mxu0 0.0
    %562 = vmatpush1.msra.mxu0 %v40
    %563 = vmatprep.subr.mxu0 0.0
    %564 = vmatpush1.msra.mxu0 0.0
    %565 = vmatprep.subr.mxu0 0.0
    %566 = vmatpush1.msra.mxu0 0.0
    %567 = vmatprep.subr.mxu0 0.0
    %568 = vmatpush1.msra.mxu0 0.0
    %569 = vmatprep.subr.mxu0 0.0
    %570 = vmatpush1.msra.mxu0 0.0
    %571 = vmatprep.subr.mxu0 0.0
    %572 = vmatpush1.msra.mxu0 0.0
    %573 = vmatprep.subr.mxu0 0.0
    %574 = vmatpush1.msra.mxu0 0.0
    %575 = vmatprep.subr.mxu0 0.0
    %576 = vmatpush1.msra.mxu0 0.0
    %577 = vmatprep.subr.mxu0 0.0
    %578 = vmatpush1.msra.mxu0 0.0
    %579 = vmatprep.subr.mxu0 0.0
    %580 = vmatpush1.msra.mxu0 0.0
    %581 = vmatprep.subr.mxu0 0.0
    %582 = vmatpush1.msra.mxu0 0.0
    %583 = vmatprep.subr.mxu0 0.0
    %584 = vmatpush1.msra.mxu0 0.0
    %585 = vmatprep.subr.mxu0 0.0
    %586 = vmatpush1.msra.mxu0 0.0
    %587 = vmatprep.subr.mxu0 0.0
    %588 = vmatpush1.msra.mxu0 0.0
    %589 = vmatprep.subr.mxu0 0.0
    %590 = vmatpush1.msra.mxu0 0.0
    %591 = vmatprep.subr.mxu0 0.0
    %592 = vmatpush1.msra.mxu0 0.0
    %593 = vmatprep.subr.mxu0 0.0
    %594 = vmatpush1.msra.mxu0 0.0
    %595 = vmatprep.subr.mxu0 0.0
    %596 = vmatpush1.msra.mxu0 0.0
    %597 = vmatprep.subr.mxu0 0.0
    %598 = vmatpush1.msra.mxu0 0.0
    %599 = vmatprep.subr.mxu0 0.0
    %600 = vmatpush1.msra.mxu0 0.0
    %601 = vmatprep.subr.mxu0 0.0
    %602 = vmatpush1.msra.mxu0 0.0
    %603 = vmatprep.subr.mxu0 0.0
    %604 = vmatpush1.msra.mxu0 0.0
    %605 = vmatprep.subr.mxu0 0.0
    %606 = vmatpush1.msra.mxu0 0.0
    %607 = vmatprep.subr.mxu0 0.0
    %608 = vmatpush1.msra.mxu0 0.0
    %609 = vmatprep.subr.mxu0 0.0
    %610 = vmatpush1.msra.mxu0 0.0
    %611 = vmatprep.subr.mxu0 0.0
    %612 = vmatpush1.msra.mxu0 0.0
    %613 = vmatprep.subr.mxu0 0.0
    %614 = vmatpush1.msra.mxu0 0.0
    %615 = vmatprep.subr.mxu0 0.0
    %616 = vmatpush1.msra.mxu0 0.0
    %617 = vmatprep.subr.mxu0 0.0
    %618 = vmatpush1.msra.mxu0 0.0
    %619 = vmatprep.mubr.f32.mxu0 0.0
    %620 = vmatmul.mubr.f32.gmra.mrb[0].mxu0 %v553
    %v621 = vpop.f32.mrb[0].mxu0
    %v622 = vadd.f32 0.0, %v621
    %v623 = vpop.f32.mrb[0].mxu0
    %624 = vdwg.mxu0
    %v625 = vadd.f32 %v127, %v622
    %v626 = vxor.u32 %v625, 2147483648
    %v627 = vmul.f32 %v626, 1.442695
    %v628 = vpow.pop %v627
    %v629 = vadd.f32 %v628, 1.0
    %v630 = vrcp.pop %v629
    %v631 = vmul.f32 1.0, %v630
    %v632 = vtanh.pop %v625
    %v634 = vrot.slane %v542, 6
    %v636 = vmul.f32 %v631, %v634
    %638 = vrot.lane.b32.xlu0 %v632, 32
    %v639 = vpop.permute.xlu0 %638
    %v641 = vmul.f32 %v631, %v639
    %643 = vrot.lane.b32.xlu0 %v641, 32
    %v644 = vpop.permute.xlu0 %643
    %v646 = vadd.f32 %v636, %v644
    %v647 = vtanh.pop %v646
    %649 = vrot.lane.b32.xlu0 %v647, 32
    %v650 = vpop.permute.xlu0 %649
    %v652 = vmul.f32 %v631, %v650
    %654 = vrot.lane.b32.xlu0 %v652, 64
    %v655 = vpop.permute.xlu0 %654
    %v656 = vsel %vm130, %v655, 0
    %658 = vmatprep.subr.mxu0 0.0
    %659 = vmatpush1.msra.mxu0 %v37
    %660 = vmatprep.subr.mxu0 0.0
    %661 = vmatpush1.msra.mxu0 %v38
    %662 = vmatprep.subr.mxu0 0.0
    %663 = vmatpush1.msra.mxu0 %v39
    %664 = vmatprep.subr.mxu0 0.0
    %665 = vmatpush1.msra.mxu0 %v40
    %666 = vmatprep.subr.mxu0 0.0
    %667 = vmatpush1.msra.mxu0 0.0
    %668 = vmatprep.subr.mxu0 0.0
    %669 = vmatpush1.msra.mxu0 0.0
    %670 = vmatprep.subr.mxu0 0.0
    %671 = vmatpush1.msra.mxu0 0.0
    %672 = vmatprep.subr.mxu0 0.0
    %673 = vmatpush1.msra.mxu0 0.0
    %674 = vmatprep.subr.mxu0 0.0
    %675 = vmatpush1.msra.mxu0 0.0
    %676 = vmatprep.subr.mxu0 0.0
    %677 = vmatpush1.msra.mxu0 0.0
    %678 = vmatprep.subr.mxu0 0.0
    %679 = vmatpush1.msra.mxu0 0.0
    %680 = vmatprep.subr.mxu0 0.0
    %681 = vmatpush1.msra.mxu0 0.0
    %682 = vmatprep.subr.mxu0 0.0
    %683 = vmatpush1.msra.mxu0 0.0
    %684 = vmatprep.subr.mxu0 0.0
    %685 = vmatpush1.msra.mxu0 0.0
    %686 = vmatprep.subr.mxu0 0.0
    %687 = vmatpush1.msra.mxu0 0.0
    %688 = vmatprep.subr.mxu0 0.0
    %689 = vmatpush1.msra.mxu0 0.0
    %690 = vmatprep.subr.mxu0 0.0
    %691 = vmatpush1.msra.mxu0 0.0
    %692 = vmatprep.subr.mxu0 0.0
    %693 = vmatpush1.msra.mxu0 0.0
    %694 = vmatprep.subr.mxu0 0.0
    %695 = vmatpush1.msra.mxu0 0.0
    %696 = vmatprep.subr.mxu0 0.0
    %697 = vmatpush1.msra.mxu0 0.0
    %698 = vmatprep.subr.mxu0 0.0
    %699 = vmatpush1.msra.mxu0 0.0
    %700 = vmatprep.subr.mxu0 0.0
    %701 = vmatpush1.msra.mxu0 0.0
    %702 = vmatprep.subr.mxu0 0.0
    %703 = vmatpush1.msra.mxu0 0.0
    %704 = vmatprep.subr.mxu0 0.0
    %705 = vmatpush1.msra.mxu0 0.0
    %706 = vmatprep.subr.mxu0 0.0
    %707 = vmatpush1.msra.mxu0 0.0
    %708 = vmatprep.subr.mxu0 0.0
    %709 = vmatpush1.msra.mxu0 0.0
    %710 = vmatprep.subr.mxu0 0.0
    %711 = vmatpush1.msra.mxu0 0.0
    %712 = vmatprep.subr.mxu0 0.0
    %713 = vmatpush1.msra.mxu0 0.0
    %714 = vmatprep.subr.mxu0 0.0
    %715 = vmatpush1.msra.mxu0 0.0
    %716 = vmatprep.subr.mxu0 0.0
    %717 = vmatpush1.msra.mxu0 0.0
    %718 = vmatprep.subr.mxu0 0.0
    %719 = vmatpush1.msra.mxu0 0.0
    %720 = vmatprep.subr.mxu0 0.0
    %721 = vmatpush1.msra.mxu0 0.0
    %722 = vmatprep.mubr.f32.mxu0 0.0
    %723 = vmatmul.mubr.f32.gmra.mrb[0].mxu0 %v656
    %v724 = vpop.f32.mrb[0].mxu0
    %v725 = vadd.f32 0.0, %v724
    %v726 = vpop.f32.mrb[0].mxu0
    %727 = vdwg.mxu0
    %v729 = vrot.slane %v725, 6
    %v731 = vadd.f32 %v127, %v729
    %v732 = vxor.u32 %v731, 2147483648
    %v733 = vmul.f32 %v732, 1.442695
    %v734 = vpow.pop %v733
    %v735 = vadd.f32 %v734, 1.0
    %v736 = vrcp.pop %v735
    %v737 = vmul.f32 1.0, %v736
    %v738 = vtanh.pop %v731
    %v740 = vrot.slane %v646, 6
    %v742 = vmul.f32 %v737, %v740
    %744 = vrot.lane.b32.xlu0 %v738, 32
    %v745 = vpop.permute.xlu0 %744
    %v747 = vmul.f32 %v737, %v745
    %749 = vrot.lane.b32.xlu0 %v747, 32
    %v750 = vpop.permute.xlu0 %749
    %v752 = vadd.f32 %v742, %v750
    %v753 = vtanh.pop %v752
    %755 = vrot.lane.b32.xlu0 %v753, 32
    %v756 = vpop.permute.xlu0 %755
    %v758 = vmul.f32 %v737, %v756
    %v760 = vrot.slane %v758, 2
    %761 = vrot.lane.b32.xlu0 %v760, 64
    %v762 = vpop.permute.xlu0 %761
    %v763 = vsel %vm130, %v762, 0
    %765 = vmatprep.subr.mxu0 0.0
    %766 = vmatpush1.msra.mxu0 %v37
    %767 = vmatprep.subr.mxu0 0.0
    %768 = vmatpush1.msra.mxu0 %v38
    %769 = vmatprep.subr.mxu0 0.0
    %770 = vmatpush1.msra.mxu0 %v39
    %771 = vmatprep.subr.mxu0 0.0
    %772 = vmatpush1.msra.mxu0 %v40
    %773 = vmatprep.subr.mxu0 0.0
    %774 = vmatpush1.msra.mxu0 0.0
    %775 = vmatprep.subr.mxu0 0.0
    %776 = vmatpush1.msra.mxu0 0.0
    %777 = vmatprep.subr.mxu0 0.0
    %778 = vmatpush1.msra.mxu0 0.0
    %779 = vmatprep.subr.mxu0 0.0
    %780 = vmatpush1.msra.mxu0 0.0
    %781 = vmatprep.subr.mxu0 0.0
    %782 = vmatpush1.msra.mxu0 0.0
    %783 = vmatprep.subr.mxu0 0.0
    %784 = vmatpush1.msra.mxu0 0.0
    %785 = vmatprep.subr.mxu0 0.0
    %786 = vmatpush1.msra.mxu0 0.0
    %787 = vmatprep.subr.mxu0 0.0
    %788 = vmatpush1.msra.mxu0 0.0
    %789 = vmatprep.subr.mxu0 0.0
    %790 = vmatpush1.msra.mxu0 0.0
    %791 = vmatprep.subr.mxu0 0.0
    %792 = vmatpush1.msra.mxu0 0.0
    %793 = vmatprep.subr.mxu0 0.0
    %794 = vmatpush1.msra.mxu0 0.0
    %795 = vmatprep.subr.mxu0 0.0
    %796 = vmatpush1.msra.mxu0 0.0
    %797 = vmatprep.subr.mxu0 0.0
    %798 = vmatpush1.msra.mxu0 0.0
    %799 = vmatprep.subr.mxu0 0.0
    %800 = vmatpush1.msra.mxu0 0.0
    %801 = vmatprep.subr.mxu0 0.0
    %802 = vmatpush1.msra.mxu0 0.0
    %803 = vmatprep.subr.mxu0 0.0
    %804 = vmatpush1.msra.mxu0 0.0
    %805 = vmatprep.subr.mxu0 0.0
    %806 = vmatpush1.msra.mxu0 0.0
    %807 = vmatprep.subr.mxu0 0.0
    %808 = vmatpush1.msra.mxu0 0.0
    %809 = vmatprep.subr.mxu0 0.0
    %810 = vmatpush1.msra.mxu0 0.0
    %811 = vmatprep.subr.mxu0 0.0
    %812 = vmatpush1.msra.mxu0 0.0
    %813 = vmatprep.subr.mxu0 0.0
    %814 = vmatpush1.msra.mxu0 0.0
    %815 = vmatprep.subr.mxu0 0.0
    %816 = vmatpush1.msra.mxu0 0.0
    %817 = vmatprep.subr.mxu0 0.0
    %818 = vmatpush1.msra.mxu0 0.0
    %819 = vmatprep.subr.mxu0 0.0
    %820 = vmatpush1.msra.mxu0 0.0
    %821 = vmatprep.subr.mxu0 0.0
    %822 = vmatpush1.msra.mxu0 0.0
    %823 = vmatprep.subr.mxu0 0.0
    %824 = vmatpush1.msra.mxu0 0.0
    %825 = vmatprep.subr.mxu0 0.0
    %826 = vmatpush1.msra.mxu0 0.0
    %827 = vmatprep.subr.mxu0 0.0
    %828 = vmatpush1.msra.mxu0 0.0
    %829 = vmatprep.mubr.f32.mxu0 0.0
    %830 = vmatmul.mubr.f32.gmra.mrb[0].mxu0 %v763
    %v831 = vpop.f32.mrb[0].mxu0
    %v832 = vadd.f32 0.0, %v831
    %v833 = vpop.f32.mrb[0].mxu0
    %834 = vdwg.mxu0
    %v836 = vrot.slane %v832, 4
    %v838 = vadd.f32 %v127, %v836
    %v839 = vxor.u32 %v838, 2147483648
    %v840 = vmul.f32 %v839, 1.442695
    %v841 = vpow.pop %v840
    %v842 = vadd.f32 %v841, 1.0
    %v843 = vrcp.pop %v842
    %v844 = vmul.f32 1.0, %v843
    %v845 = vtanh.pop %v838
    %v847 = vrot.slane %v752, 6
    %v849 = vmul.f32 %v844, %v847
    %851 = vrot.lane.b32.xlu0 %v845, 32
    %v852 = vpop.permute.xlu0 %851
    %v854 = vmul.f32 %v844, %v852
    %856 = vrot.lane.b32.xlu0 %v854, 32
    %v857 = vpop.permute.xlu0 %856
    %v859 = vadd.f32 %v849, %v857
    %v860 = vtanh.pop %v859
    %862 = vrot.lane.b32.xlu0 %v860, 32
    %v863 = vpop.permute.xlu0 %862
    %v865 = vmul.f32 %v844, %v863
    %v867 = vrot.slane %v865, 4
    %868 = vrot.lane.b32.xlu0 %v867, 64
    %v869 = vpop.permute.xlu0 %868
    %v870 = vsel %vm130, %v869, 0
    %872 = vmatprep.subr.mxu0 0.0
    %873 = vmatpush1.msra.mxu0 %v37
    %874 = vmatprep.subr.mxu0 0.0
    %875 = vmatpush1.msra.mxu0 %v38
    %876 = vmatprep.subr.mxu0 0.0
    %877 = vmatpush1.msra.mxu0 %v39
    %878 = vmatprep.subr.mxu0 0.0
    %879 = vmatpush1.msra.mxu0 %v40
    %880 = vmatprep.subr.mxu0 0.0
    %881 = vmatpush1.msra.mxu0 0.0
    %882 = vmatprep.subr.mxu0 0.0
    %883 = vmatpush1.msra.mxu0 0.0
    %884 = vmatprep.subr.mxu0 0.0
    %885 = vmatpush1.msra.mxu0 0.0
    %886 = vmatprep.subr.mxu0 0.0
    %887 = vmatpush1.msra.mxu0 0.0
    %888 = vmatprep.subr.mxu0 0.0
    %889 = vmatpush1.msra.mxu0 0.0
    %890 = vmatprep.subr.mxu0 0.0
    %891 = vmatpush1.msra.mxu0 0.0
    %892 = vmatprep.subr.mxu0 0.0
    %893 = vmatpush1.msra.mxu0 0.0
    %894 = vmatprep.subr.mxu0 0.0
    %895 = vmatpush1.msra.mxu0 0.0
    %896 = vmatprep.subr.mxu0 0.0
    %897 = vmatpush1.msra.mxu0 0.0
    %898 = vmatprep.subr.mxu0 0.0
    %899 = vmatpush1.msra.mxu0 0.0
    %900 = vmatprep.subr.mxu0 0.0
    %901 = vmatpush1.msra.mxu0 0.0
    %902 = vmatprep.subr.mxu0 0.0
    %903 = vmatpush1.msra.mxu0 0.0
    %904 = vmatprep.subr.mxu0 0.0
    %905 = vmatpush1.msra.mxu0 0.0
    %906 = vmatprep.subr.mxu0 0.0
    %907 = vmatpush1.msra.mxu0 0.0
    %908 = vmatprep.subr.mxu0 0.0
    %909 = vmatpush1.msra.mxu0 0.0
    %910 = vmatprep.subr.mxu0 0.0
    %911 = vmatpush1.msra.mxu0 0.0
    %912 = vmatprep.subr.mxu0 0.0
    %913 = vmatpush1.msra.mxu0 0.0
    %914 = vmatprep.subr.mxu0 0.0
    %915 = vmatpush1.msra.mxu0 0.0
    %916 = vmatprep.subr.mxu0 0.0
    %917 = vmatpush1.msra.mxu0 0.0
    %918 = vmatprep.subr.mxu0 0.0
    %919 = vmatpush1.msra.mxu0 0.0
    %920 = vmatprep.subr.mxu0 0.0
    %921 = vmatpush1.msra.mxu0 0.0
    %922 = vmatprep.subr.mxu0 0.0
    %923 = vmatpush1.msra.mxu0 0.0
    %924 = vmatprep.subr.mxu0 0.0
    %925 = vmatpush1.msra.mxu0 0.0
    %926 = vmatprep.subr.mxu0 0.0
    %927 = vmatpush1.msra.mxu0 0.0
    %928 = vmatprep.subr.mxu0 0.0
    %929 = vmatpush1.msra.mxu0 0.0
    %930 = vmatprep.subr.mxu0 0.0
    %931 = vmatpush1.msra.mxu0 0.0
    %932 = vmatprep.subr.mxu0 0.0
    %933 = vmatpush1.msra.mxu0 0.0
    %934 = vmatprep.subr.mxu0 0.0
    %935 = vmatpush1.msra.mxu0 0.0
    %936 = vmatprep.mubr.f32.mxu0 0.0
    %937 = vmatmul.mubr.f32.gmra.mrb[0].mxu0 %v870
    %v938 = vpop.f32.mrb[0].mxu0
    %v939 = vadd.f32 0.0, %v938
    %v940 = vpop.f32.mrb[0].mxu0
    %941 = vdwg.mxu0
    %v943 = vrot.slane %v939, 2
    %v945 = vadd.f32 %v127, %v943
    %v946 = vxor.u32 %v945, 2147483648
    %v947 = vmul.f32 %v946, 1.442695
    %v948 = vpow.pop %v947
    %v949 = vadd.f32 %v948, 1.0
    %v950 = vrcp.pop %v949
    %v951 = vmul.f32 1.0, %v950
    %v952 = vtanh.pop %v945
    %v954 = vrot.slane %v859, 6
    %v956 = vmul.f32 %v951, %v954
    %958 = vrot.lane.b32.xlu0 %v952, 32
    %v959 = vpop.permute.xlu0 %958
    %v961 = vmul.f32 %v951, %v959
    %963 = vrot.lane.b32.xlu0 %v961, 32
    %v964 = vpop.permute.xlu0 %963
    %v966 = vadd.f32 %v956, %v964
    %v967 = vtanh.pop %v966
    %969 = vrot.lane.b32.xlu0 %v967, 32
    %v970 = vpop.permute.xlu0 %969
    %v972 = vmul.f32 %v951, %v970
    %vm973 = vcmask 1041408
    %v974 = vsel %vm973, %v228, %v334
    %vm975 = vcmask 1043456
    %v976 = vsel %vm975, %v974, %v441
    %vm977 = vcmask 1045504
    %v978 = vsel %vm977, %v976, %v548
    %v979 = vsel %vm973, %v652, %v758
    %v980 = vsel %vm975, %v979, %v865
    %v981 = vsel %vm977, %v980, %v972
    %v982 = vld [vmem:[%s4] sm:$0xff]
    %v983 = vld [vmem:[%s4 + $0x8] sm:$0xff]
    %v984 = vld [vmem:[%s4 + $0x10] sm:$0xff]
    %v985 = vld [vmem:[%s4 + $0x18] sm:$0xff]
    %v986 = vld [vmem:[%s5] sm:$0xff]
    %v987 = vld [vmem:[%s5 + $0x8] sm:$0xff]
    %v988 = vld [vmem:[%s5 + $0x10] sm:$0xff]
    %v989 = vld [vmem:[%s5 + $0x18] sm:$0xff]
    %v990 = vld [vmem:[%s6] sm:$0x1]
    %v992 = vlaneseq
    %v993 = vshrl.u32 %v992, 7
    %v994 = vsub.s32 0, %v993
    %v995 = vrot.slane %v990, %v994
    %999 = vrot.lane.b32.xlu0 %v978, 64
    %v1000 = vpop.permute.xlu0 %999
    %1001 = vrot.lane.b32.xlu0 %v981, 64
    %v1002 = vpop.permute.xlu0 %1001
    %v1003 = vsel %vm130, %v1000, 0
    %v1005 = vsel %vm130, %v1002, 0
    %1007 = vmatprep.subr.mxu0 0.0
    %1008 = vmatpush1.msra.mxu0 %v982
    %1009 = vmatprep.subr.mxu0 0.0
    %1010 = vmatpush1.msra.mxu0 %v983
    %1011 = vmatprep.subr.mxu0 0.0
    %1012 = vmatpush1.msra.mxu0 %v984
    %1013 = vmatprep.subr.mxu0 0.0
    %1014 = vmatpush1.msra.mxu0 %v985
    %1015 = vmatprep.subr.mxu0 0.0
    %1016 = vmatpush1.msra.mxu0 0.0
    %1017 = vmatprep.subr.mxu0 0.0
    %1018 = vmatpush1.msra.mxu0 0.0
    %1019 = vmatprep.subr.mxu0 0.0
    %1020 = vmatpush1.msra.mxu0 0.0
    %1021 = vmatprep.subr.mxu0 0.0
    %1022 = vmatpush1.msra.mxu0 0.0
    %1023 = vmatprep.subr.mxu0 0.0
    %1024 = vmatpush1.msra.mxu0 0.0
    %1025 = vmatprep.subr.mxu0 0.0
    %1026 = vmatpush1.msra.mxu0 0.0
    %1027 = vmatprep.subr.mxu0 0.0
    %1028 = vmatpush1.msra.mxu0 0.0
    %1029 = vmatprep.subr.mxu0 0.0
    %1030 = vmatpush1.msra.mxu0 0.0
    %1031 = vmatprep.subr.mxu0 0.0
    %1032 = vmatpush1.msra.mxu0 0.0
    %1033 = vmatprep.subr.mxu0 0.0
    %1034 = vmatpush1.msra.mxu0 0.0
    %1035 = vmatprep.subr.mxu0 0.0
    %1036 = vmatpush1.msra.mxu0 0.0
    %1037 = vmatprep.subr.mxu0 0.0
    %1038 = vmatpush1.msra.mxu0 0.0
    %1039 = vmatprep.subr.mxu0 0.0
    %1040 = vmatpush1.msra.mxu0 0.0
    %1041 = vmatprep.subr.mxu0 0.0
    %1042 = vmatpush1.msra.mxu0 0.0
    %1043 = vmatprep.subr.mxu0 0.0
    %1044 = vmatpush1.msra.mxu0 0.0
    %1045 = vmatprep.subr.mxu0 0.0
    %1046 = vmatpush1.msra.mxu0 0.0
    %1047 = vmatprep.subr.mxu0 0.0
    %1048 = vmatpush1.msra.mxu0 0.0
    %1049 = vmatprep.subr.mxu0 0.0
    %1050 = vmatpush1.msra.mxu0 0.0
    %1051 = vmatprep.subr.mxu0 0.0
    %1052 = vmatpush1.msra.mxu0 0.0
    %1053 = vmatprep.subr.mxu0 0.0
    %1054 = vmatpush1.msra.mxu0 0.0
    %1055 = vmatprep.subr.mxu0 0.0
    %1056 = vmatpush1.msra.mxu0 0.0
    %1057 = vmatprep.subr.mxu0 0.0
    %1058 = vmatpush1.msra.mxu0 0.0
    %1059 = vmatprep.subr.mxu0 0.0
    %1060 = vmatpush1.msra.mxu0 0.0
    %1061 = vmatprep.subr.mxu0 0.0
    %1062 = vmatpush1.msra.mxu0 0.0
    %1063 = vmatprep.subr.mxu0 0.0
    %1064 = vmatpush1.msra.mxu0 0.0
    %1065 = vmatprep.subr.mxu0 0.0
    %1066 = vmatpush1.msra.mxu0 0.0
    %1067 = vmatprep.subr.mxu0 0.0
    %1068 = vmatpush1.msra.mxu0 0.0
    %1069 = vmatprep.subr.mxu0 0.0
    %1070 = vmatpush1.msra.mxu0 0.0
    %1071 = vmatprep.mubr.f32.mxu0 0.0
    %1072 = vmatmul.mubr.f32.gmra.mrb[0].mxu0 %v1003
    %v1073 = vpop.f32.mrb[0].mxu0
    %v1074 = vadd.f32 %v995, %v1073
    %v1075 = vpop.f32.mrb[0].mxu0
    %1076 = vmatprep.mubr.f32.mxu0 0.0
    %1077 = vmatmul.mubr.f32.gmra.mrb[0].mxu0 %v1005
    %v1078 = vpop.f32.mrb[0].mxu0
    %v1079 = vadd.f32 %v995, %v1078
    %v1080 = vpop.f32.mrb[0].mxu0
    %1081 = vdwg.mxu0
    %1082 = vmatprep.subr.mxu0 0.0
    %1083 = vmatpush1.msra.mxu0 %v986
    %1084 = vmatprep.subr.mxu0 0.0
    %1085 = vmatpush1.msra.mxu0 %v987
    %1086 = vmatprep.subr.mxu0 0.0
    %1087 = vmatpush1.msra.mxu0 %v988
    %1088 = vmatprep.subr.mxu0 0.0
    %1089 = vmatpush1.msra.mxu0 %v989
    %1090 = vmatprep.subr.mxu0 0.0
    %1091 = vmatpush1.msra.mxu0 0.0
    %1092 = vmatprep.subr.mxu0 0.0
    %1093 = vmatpush1.msra.mxu0 0.0
    %1094 = vmatprep.subr.mxu0 0.0
    %1095 = vmatpush1.msra.mxu0 0.0
    %1096 = vmatprep.subr.mxu0 0.0
    %1097 = vmatpush1.msra.mxu0 0.0
    %1098 = vmatprep.subr.mxu0 0.0
    %1099 = vmatpush1.msra.mxu0 0.0
    %1100 = vmatprep.subr.mxu0 0.0
    %1101 = vmatpush1.msra.mxu0 0.0
    %1102 = vmatprep.subr.mxu0 0.0
    %1103 = vmatpush1.msra.mxu0 0.0
    %1104 = vmatprep.subr.mxu0 0.0
    %1105 = vmatpush1.msra.mxu0 0.0
    %1106 = vmatprep.subr.mxu0 0.0
    %1107 = vmatpush1.msra.mxu0 0.0
    %1108 = vmatprep.subr.mxu0 0.0
    %1109 = vmatpush1.msra.mxu0 0.0
    %1110 = vmatprep.subr.mxu0 0.0
    %1111 = vmatpush1.msra.mxu0 0.0
    %1112 = vmatprep.subr.mxu0 0.0
    %1113 = vmatpush1.msra.mxu0 0.0
    %1114 = vmatprep.subr.mxu0 0.0
    %1115 = vmatpush1.msra.mxu0 0.0
    %1116 = vmatprep.subr.mxu0 0.0
    %1117 = vmatpush1.msra.mxu0 0.0
    %1118 = vmatprep.subr.mxu0 0.0
    %1119 = vmatpush1.msra.mxu0 0.0
    %1120 = vmatprep.subr.mxu0 0.0
    %1121 = vmatpush1.msra.mxu0 0.0
    %1122 = vmatprep.subr.mxu0 0.0
    %1123 = vmatpush1.msra.mxu0 0.0
    %1124 = vmatprep.subr.mxu0 0.0
    %1125 = vmatpush1.msra.mxu0 0.0
    %1126 = vmatprep.subr.mxu0 0.0
    %1127 = vmatpush1.msra.mxu0 0.0
    %1128 = vmatprep.subr.mxu0 0.0
    %1129 = vmatpush1.msra.mxu0 0.0
    %1130 = vmatprep.subr.mxu0 0.0
    %1131 = vmatpush1.msra.mxu0 0.0
    %1132 = vmatprep.subr.mxu0 0.0
    %1133 = vmatpush1.msra.mxu0 0.0
    %1134 = vmatprep.subr.mxu0 0.0
    %1135 = vmatpush1.msra.mxu0 0.0
    %1136 = vmatprep.subr.mxu0 0.0
    %1137 = vmatpush1.msra.mxu0 0.0
    %1138 = vmatprep.subr.mxu0 0.0
    %1139 = vmatpush1.msra.mxu0 0.0
    %1140 = vmatprep.subr.mxu0 0.0
    %1141 = vmatpush1.msra.mxu0 0.0
    %1142 = vmatprep.subr.mxu0 0.0
    %1143 = vmatpush1.msra.mxu0 0.0
    %1144 = vmatprep.subr.mxu0 0.0
    %1145 = vmatpush1.msra.mxu0 0.0
    %1146 = vmatprep.mubr.f32.mxu0 0.0
    %1147 = vmatmul.mubr.f32.gmra.mrb[0].mxu0 %v132
    %v1148 = vpop.f32.mrb[0].mxu0
    %v1149 = vadd.f32 0.0, %v1148
    %v1150 = vpop.f32.mrb[0].mxu0
    %1151 = vdwg.mxu0
    %v1152 = vadd.f32 %v1074, %v1149
    %v1153 = vxor.u32 %v1152, 2147483648
    %v1154 = vmul.f32 %v1153, 1.442695
    %v1155 = vpow.pop %v1154
    %v1156 = vadd.f32 %v1155, 1.0
    %v1157 = vrcp.pop %v1156
    %v1158 = vmul.f32 1.0, %v1157
    %v1159 = vtanh.pop %v1152
    %v1160 = vmul.f32 %v1158, 0.0
    %1162 = vrot.lane.b32.xlu0 %v1159, 32
    %v1163 = vpop.permute.xlu0 %1162
    %v1165 = vmul.f32 %v1158, %v1163
    %1167 = vrot.lane.b32.xlu0 %v1165, 32
    %v1168 = vpop.permute.xlu0 %1167
    %v1170 = vadd.f32 %v1160, %v1168
    %v1171 = vtanh.pop %v1170
    %1173 = vrot.lane.b32.xlu0 %v1171, 32
    %v1174 = vpop.permute.xlu0 %1173
    %v1176 = vmul.f32 %v1158, %v1174
    %1178 = vrot.lane.b32.xlu0 %v1176, 64
    %v1179 = vpop.permute.xlu0 %1178
    %v1180 = vsel %vm130, %v1179, 0
    %1182 = vmatprep.subr.mxu0 0.0
    %1183 = vmatpush1.msra.mxu0 %v986
    %1184 = vmatprep.subr.mxu0 0.0
    %1185 = vmatpush1.msra.mxu0 %v987
    %1186 = vmatprep.subr.mxu0 0.0
    %1187 = vmatpush1.msra.mxu0 %v988
    %1188 = vmatprep.subr.mxu0 0.0
    %1189 = vmatpush1.msra.mxu0 %v989
    %1190 = vmatprep.subr.mxu0 0.0
    %1191 = vmatpush1.msra.mxu0 0.0
    %1192 = vmatprep.subr.mxu0 0.0
    %1193 = vmatpush1.msra.mxu0 0.0
    %1194 = vmatprep.subr.mxu0 0.0
    %1195 = vmatpush1.msra.mxu0 0.0
    %1196 = vmatprep.subr.mxu0 0.0
    %1197 = vmatpush1.msra.mxu0 0.0
    %1198 = vmatprep.subr.mxu0 0.0
    %1199 = vmatpush1.msra.mxu0 0.0
    %1200 = vmatprep.subr.mxu0 0.0
    %1201 = vmatpush1.msra.mxu0 0.0
    %1202 = vmatprep.subr.mxu0 0.0
    %1203 = vmatpush1.msra.mxu0 0.0
    %1204 = vmatprep.subr.mxu0 0.0
    %1205 = vmatpush1.msra.mxu0 0.0
    %1206 = vmatprep.subr.mxu0 0.0
    %1207 = vmatpush1.msra.mxu0 0.0
    %1208 = vmatprep.subr.mxu0 0.0
    %1209 = vmatpush1.msra.mxu0 0.0
    %1210 = vmatprep.subr.mxu0 0.0
    %1211 = vmatpush1.msra.mxu0 0.0
    %1212 = vmatprep.subr.mxu0 0.0
    %1213 = vmatpush1.msra.mxu0 0.0
    %1214 = vmatprep.subr.mxu0 0.0
    %1215 = vmatpush1.msra.mxu0 0.0
    %1216 = vmatprep.subr.mxu0 0.0
    %1217 = vmatpush1.msra.mxu0 0.0
    %1218 = vmatprep.subr.mxu0 0.0
    %1219 = vmatpush1.msra.mxu0 0.0
    %1220 = vmatprep.subr.mxu0 0.0
    %1221 = vmatpush1.msra.mxu0 0.0
    %1222 = vmatprep.subr.mxu0 0.0
    %1223 = vmatpush1.msra.mxu0 0.0
    %1224 = vmatprep.subr.mxu0 0.0
    %1225 = vmatpush1.msra.mxu0 0.0
    %1226 = vmatprep.subr.mxu0 0.0
    %1227 = vmatpush1.msra.mxu0 0.0
    %1228 = vmatprep.subr.mxu0 0.0
    %1229 = vmatpush1.msra.mxu0 0.0
    %1230 = vmatprep.subr.mxu0 0.0
    %1231 = vmatpush1.msra.mxu0 0.0
    %1232 = vmatprep.subr.mxu0 0.0
    %1233 = vmatpush1.msra.mxu0 0.0
    %1234 = vmatprep.subr.mxu0 0.0
    %1235 = vmatpush1.msra.mxu0 0.0
    %1236 = vmatprep.subr.mxu0 0.0
    %1237 = vmatpush1.msra.mxu0 0.0
    %1238 = vmatprep.subr.mxu0 0.0
    %1239 = vmatpush1.msra.mxu0 0.0
    %1240 = vmatprep.subr.mxu0 0.0
    %1241 = vmatpush1.msra.mxu0 0.0
    %1242 = vmatprep.subr.mxu0 0.0
    %1243 = vmatpush1.msra.mxu0 0.0
    %1244 = vmatprep.subr.mxu0 0.0
    %1245 = vmatpush1.msra.mxu0 0.0
    %1246 = vmatprep.mubr.f32.mxu0 0.0
    %1247 = vmatmul.mubr.f32.gmra.mrb[0].mxu0 %v1180
    %v1248 = vpop.f32.mrb[0].mxu0
    %v1249 = vadd.f32 0.0, %v1248
    %v1250 = vpop.f32.mrb[0].mxu0
    %1251 = vdwg.mxu0
    %v1253 = vrot.slane %v1249, 6
    %v1255 = vadd.f32 %v1074, %v1253
    %v1256 = vxor.u32 %v1255, 2147483648
    %v1257 = vmul.f32 %v1256, 1.442695
    %v1258 = vpow.pop %v1257
    %v1259 = vadd.f32 %v1258, 1.0
    %v1260 = vrcp.pop %v1259
    %v1261 = vmul.f32 1.0, %v1260
    %v1262 = vtanh.pop %v1255
    %v1264 = vrot.slane %v1170, 6
    %v1266 = vmul.f32 %v1261, %v1264
    %1268 = vrot.lane.b32.xlu0 %v1262, 32
    %v1269 = vpop.permute.xlu0 %1268
    %v1271 = vmul.f32 %v1261, %v1269
    %1273 = vrot.lane.b32.xlu0 %v1271, 32
    %v1274 = vpop.permute.xlu0 %1273
    %v1276 = vadd.f32 %v1266, %v1274
    %v1277 = vtanh.pop %v1276
    %1279 = vrot.lane.b32.xlu0 %v1277, 32
    %v1280 = vpop.permute.xlu0 %1279
    %v1282 = vmul.f32 %v1261, %v1280
    %v1284 = vrot.slane %v1282, 2
    %1285 = vrot.lane.b32.xlu0 %v1284, 64
    %v1286 = vpop.permute.xlu0 %1285
    %v1287 = vsel %vm130, %v1286, 0
    %1289 = vmatprep.subr.mxu0 0.0
    %1290 = vmatpush1.msra.mxu0 %v986
    %1291 = vmatprep.subr.mxu0 0.0
    %1292 = vmatpush1.msra.mxu0 %v987
    %1293 = vmatprep.subr.mxu0 0.0
    %1294 = vmatpush1.msra.mxu0 %v988
    %1295 = vmatprep.subr.mxu0 0.0
    %1296 = vmatpush1.msra.mxu0 %v989
    %1297 = vmatprep.subr.mxu0 0.0
    %1298 = vmatpush1.msra.mxu0 0.0
    %1299 = vmatprep.subr.mxu0 0.0
    %1300 = vmatpush1.msra.mxu0 0.0
    %1301 = vmatprep.subr.mxu0 0.0
    %1302 = vmatpush1.msra.mxu0 0.0
    %1303 = vmatprep.subr.mxu0 0.0
    %1304 = vmatpush1.msra.mxu0 0.0
    %1305 = vmatprep.subr.mxu0 0.0
    %1306 = vmatpush1.msra.mxu0 0.0
    %1307 = vmatprep.subr.mxu0 0.0
    %1308 = vmatpush1.msra.mxu0 0.0
    %1309 = vmatprep.subr.mxu0 0.0
    %1310 = vmatpush1.msra.mxu0 0.0
    %1311 = vmatprep.subr.mxu0 0.0
    %1312 = vmatpush1.msra.mxu0 0.0
    %1313 = vmatprep.subr.mxu0 0.0
    %1314 = vmatpush1.msra.mxu0 0.0
    %1315 = vmatprep.subr.mxu0 0.0
    %1316 = vmatpush1.msra.mxu0 0.0
    %1317 = vmatprep.subr.mxu0 0.0
    %1318 = vmatpush1.msra.mxu0 0.0
    %1319 = vmatprep.subr.mxu0 0.0
    %1320 = vmatpush1.msra.mxu0 0.0
    %1321 = vmatprep.subr.mxu0 0.0
    %1322 = vmatpush1.msra.mxu0 0.0
    %1323 = vmatprep.subr.mxu0 0.0
    %1324 = vmatpush1.msra.mxu0 0.0
    %1325 = vmatprep.subr.mxu0 0.0
    %1326 = vmatpush1.msra.mxu0 0.0
    %1327 = vmatprep.subr.mxu0 0.0
    %1328 = vmatpush1.msra.mxu0 0.0
    %1329 = vmatprep.subr.mxu0 0.0
    %1330 = vmatpush1.msra.mxu0 0.0
    %1331 = vmatprep.subr.mxu0 0.0
    %1332 = vmatpush1.msra.mxu0 0.0
    %1333 = vmatprep.subr.mxu0 0.0
    %1334 = vmatpush1.msra.mxu0 0.0
    %1335 = vmatprep.subr.mxu0 0.0
    %1336 = vmatpush1.msra.mxu0 0.0
    %1337 = vmatprep.subr.mxu0 0.0
    %1338 = vmatpush1.msra.mxu0 0.0
    %1339 = vmatprep.subr.mxu0 0.0
    %1340 = vmatpush1.msra.mxu0 0.0
    %1341 = vmatprep.subr.mxu0 0.0
    %1342 = vmatpush1.msra.mxu0 0.0
    %1343 = vmatprep.subr.mxu0 0.0
    %1344 = vmatpush1.msra.mxu0 0.0
    %1345 = vmatprep.subr.mxu0 0.0
    %1346 = vmatpush1.msra.mxu0 0.0
    %1347 = vmatprep.subr.mxu0 0.0
    %1348 = vmatpush1.msra.mxu0 0.0
    %1349 = vmatprep.subr.mxu0 0.0
    %1350 = vmatpush1.msra.mxu0 0.0
    %1351 = vmatprep.subr.mxu0 0.0
    %1352 = vmatpush1.msra.mxu0 0.0
    %1353 = vmatprep.mubr.f32.mxu0 0.0
    %1354 = vmatmul.mubr.f32.gmra.mrb[0].mxu0 %v1287
    %v1355 = vpop.f32.mrb[0].mxu0
    %v1356 = vadd.f32 0.0, %v1355
    %v1357 = vpop.f32.mrb[0].mxu0
    %1358 = vdwg.mxu0
    %v1360 = vrot.slane %v1356, 4
    %v1362 = vadd.f32 %v1074, %v1360
    %v1363 = vxor.u32 %v1362, 2147483648
    %v1364 = vmul.f32 %v1363, 1.442695
    %v1365 = vpow.pop %v1364
    %v1366 = vadd.f32 %v1365, 1.0
    %v1367 = vrcp.pop %v1366
    %v1368 = vmul.f32 1.0, %v1367
    %v1369 = vtanh.pop %v1362
    %v1371 = vrot.slane %v1276, 6
    %v1373 = vmul.f32 %v1368, %v1371
    %1375 = vrot.lane.b32.xlu0 %v1369, 32
    %v1376 = vpop.permute.xlu0 %1375
    %v1378 = vmul.f32 %v1368, %v1376
    %1380 = vrot.lane.b32.xlu0 %v1378, 32
    %v1381 = vpop.permute.xlu0 %1380
    %v1383 = vadd.f32 %v1373, %v1381
    %v1384 = vtanh.pop %v1383
    %1386 = vrot.lane.b32.xlu0 %v1384, 32
    %v1387 = vpop.permute.xlu0 %1386
    %v1389 = vmul.f32 %v1368, %v1387
    %v1391 = vrot.slane %v1389, 4
    %1392 = vrot.lane.b32.xlu0 %v1391, 64
    %v1393 = vpop.permute.xlu0 %1392
    %v1394 = vsel %vm130, %v1393, 0
    %1396 = vmatprep.subr.mxu0 0.0
    %1397 = vmatpush1.msra.mxu0 %v986
    %1398 = vmatprep.subr.mxu0 0.0
    %1399 = vmatpush1.msra.mxu0 %v987
    %1400 = vmatprep.subr.mxu0 0.0
    %1401 = vmatpush1.msra.mxu0 %v988
    %1402 = vmatprep.subr.mxu0 0.0
    %1403 = vmatpush1.msra.mxu0 %v989
    %1404 = vmatprep.subr.mxu0 0.0
    %1405 = vmatpush1.msra.mxu0 0.0
    %1406 = vmatprep.subr.mxu0 0.0
    %1407 = vmatpush1.msra.mxu0 0.0
    %1408 = vmatprep.subr.mxu0 0.0
    %1409 = vmatpush1.msra.mxu0 0.0
    %1410 = vmatprep.subr.mxu0 0.0
    %1411 = vmatpush1.msra.mxu0 0.0
    %1412 = vmatprep.subr.mxu0 0.0
    %1413 = vmatpush1.msra.mxu0 0.0
    %1414 = vmatprep.subr.mxu0 0.0
    %1415 = vmatpush1.msra.mxu0 0.0
    %1416 = vmatprep.subr.mxu0 0.0
    %1417 = vmatpush1.msra.mxu0 0.0
    %1418 = vmatprep.subr.mxu0 0.0
    %1419 = vmatpush1.msra.mxu0 0.0
    %1420 = vmatprep.subr.mxu0 0.0
    %1421 = vmatpush1.msra.mxu0 0.0
    %1422 = vmatprep.subr.mxu0 0.0
    %1423 = vmatpush1.msra.mxu0 0.0
    %1424 = vmatprep.subr.mxu0 0.0
    %1425 = vmatpush1.msra.mxu0 0.0
    %1426 = vmatprep.subr.mxu0 0.0
    %1427 = vmatpush1.msra.mxu0 0.0
    %1428 = vmatprep.subr.mxu0 0.0
    %1429 = vmatpush1.msra.mxu0 0.0
    %1430 = vmatprep.subr.mxu0 0.0
    %1431 = vmatpush1.msra.mxu0 0.0
    %1432 = vmatprep.subr.mxu0 0.0
    %1433 = vmatpush1.msra.mxu0 0.0
    %1434 = vmatprep.subr.mxu0 0.0
    %1435 = vmatpush1.msra.mxu0 0.0
    %1436 = vmatprep.subr.mxu0 0.0
    %1437 = vmatpush1.msra.mxu0 0.0
    %1438 = vmatprep.subr.mxu0 0.0
    %1439 = vmatpush1.msra.mxu0 0.0
    %1440 = vmatprep.subr.mxu0 0.0
    %1441 = vmatpush1.msra.mxu0 0.0
    %1442 = vmatprep.subr.mxu0 0.0
    %1443 = vmatpush1.msra.mxu0 0.0
    %1444 = vmatprep.subr.mxu0 0.0
    %1445 = vmatpush1.msra.mxu0 0.0
    %1446 = vmatprep.subr.mxu0 0.0
    %1447 = vmatpush1.msra.mxu0 0.0
    %1448 = vmatprep.subr.mxu0 0.0
    %1449 = vmatpush1.msra.mxu0 0.0
    %1450 = vmatprep.subr.mxu0 0.0
    %1451 = vmatpush1.msra.mxu0 0.0
    %1452 = vmatprep.subr.mxu0 0.0
    %1453 = vmatpush1.msra.mxu0 0.0
    %1454 = vmatprep.subr.mxu0 0.0
    %1455 = vmatpush1.msra.mxu0 0.0
    %1456 = vmatprep.subr.mxu0 0.0
    %1457 = vmatpush1.msra.mxu0 0.0
    %1458 = vmatprep.subr.mxu0 0.0
    %1459 = vmatpush1.msra.mxu0 0.0
    %1460 = vmatprep.mubr.f32.mxu0 0.0
    %1461 = vmatmul.mubr.f32.gmra.mrb[0].mxu0 %v1394
    %v1462 = vpop.f32.mrb[0].mxu0
    %v1463 = vadd.f32 0.0, %v1462
    %v1464 = vpop.f32.mrb[0].mxu0
    %1465 = vdwg.mxu0
    %v1467 = vrot.slane %v1463, 2
    %v1469 = vadd.f32 %v1074, %v1467
    %v1470 = vxor.u32 %v1469, 2147483648
    %v1471 = vmul.f32 %v1470, 1.442695
    %v1472 = vpow.pop %v1471
    %v1473 = vadd.f32 %v1472, 1.0
    %v1474 = vrcp.pop %v1473
    %v1475 = vmul.f32 1.0, %v1474
    %v1476 = vtanh.pop %v1469
    %v1478 = vrot.slane %v1383, 6
    %v1480 = vmul.f32 %v1475, %v1478
    %1482 = vrot.lane.b32.xlu0 %v1476, 32
    %v1483 = vpop.permute.xlu0 %1482
    %v1485 = vmul.f32 %v1475, %v1483
    %1487 = vrot.lane.b32.xlu0 %v1485, 32
    %v1488 = vpop.permute.xlu0 %1487
    %v1490 = vadd.f32 %v1480, %v1488
    %v1491 = vtanh.pop %v1490
    %1493 = vrot.lane.b32.xlu0 %v1491, 32
    %v1494 = vpop.permute.xlu0 %1493
    %v1496 = vmul.f32 %v1475, %v1494
    %v1498 = vrot.slane %v1496, 6
    %1499 = vrot.lane.b32.xlu0 %v1498, 64
    %v1500 = vpop.permute.xlu0 %1499
    %v1501 = vsel %vm130, %v1500, 0
    %1503 = vmatprep.subr.mxu0 0.0
    %1504 = vmatpush1.msra.mxu0 %v986
    %1505 = vmatprep.subr.mxu0 0.0
    %1506 = vmatpush1.msra.mxu0 %v987
    %1507 = vmatprep.subr.mxu0 0.0
    %1508 = vmatpush1.msra.mxu0 %v988
    %1509 = vmatprep.subr.mxu0 0.0
    %1510 = vmatpush1.msra.mxu0 %v989
    %1511 = vmatprep.subr.mxu0 0.0
    %1512 = vmatpush1.msra.mxu0 0.0
    %1513 = vmatprep.subr.mxu0 0.0
    %1514 = vmatpush1.msra.mxu0 0.0
    %1515 = vmatprep.subr.mxu0 0.0
    %1516 = vmatpush1.msra.mxu0 0.0
    %1517 = vmatprep.subr.mxu0 0.0
    %1518 = vmatpush1.msra.mxu0 0.0
    %1519 = vmatprep.subr.mxu0 0.0
    %1520 = vmatpush1.msra.mxu0 0.0
    %1521 = vmatprep.subr.mxu0 0.0
    %1522 = vmatpush1.msra.mxu0 0.0
    %1523 = vmatprep.subr.mxu0 0.0
    %1524 = vmatpush1.msra.mxu0 0.0
    %1525 = vmatprep.subr.mxu0 0.0
    %1526 = vmatpush1.msra.mxu0 0.0
    %1527 = vmatprep.subr.mxu0 0.0
    %1528 = vmatpush1.msra.mxu0 0.0
    %1529 = vmatprep.subr.mxu0 0.0
    %1530 = vmatpush1.msra.mxu0 0.0
    %1531 = vmatprep.subr.mxu0 0.0
    %1532 = vmatpush1.msra.mxu0 0.0
    %1533 = vmatprep.subr.mxu0 0.0
    %1534 = vmatpush1.msra.mxu0 0.0
    %1535 = vmatprep.subr.mxu0 0.0
    %1536 = vmatpush1.msra.mxu0 0.0
    %1537 = vmatprep.subr.mxu0 0.0
    %1538 = vmatpush1.msra.mxu0 0.0
    %1539 = vmatprep.subr.mxu0 0.0
    %1540 = vmatpush1.msra.mxu0 0.0
    %1541 = vmatprep.subr.mxu0 0.0
    %1542 = vmatpush1.msra.mxu0 0.0
    %1543 = vmatprep.subr.mxu0 0.0
    %1544 = vmatpush1.msra.mxu0 0.0
    %1545 = vmatprep.subr.mxu0 0.0
    %1546 = vmatpush1.msra.mxu0 0.0
    %1547 = vmatprep.subr.mxu0 0.0
    %1548 = vmatpush1.msra.mxu0 0.0
    %1549 = vmatprep.subr.mxu0 0.0
    %1550 = vmatpush1.msra.mxu0 0.0
    %1551 = vmatprep.subr.mxu0 0.0
    %1552 = vmatpush1.msra.mxu0 0.0
    %1553 = vmatprep.subr.mxu0 0.0
    %1554 = vmatpush1.msra.mxu0 0.0
    %1555 = vmatprep.subr.mxu0 0.0
    %1556 = vmatpush1.msra.mxu0 0.0
    %1557 = vmatprep.subr.mxu0 0.0
    %1558 = vmatpush1.msra.mxu0 0.0
    %1559 = vmatprep.subr.mxu0 0.0
    %1560 = vmatpush1.msra.mxu0 0.0
    %1561 = vmatprep.subr.mxu0 0.0
    %1562 = vmatpush1.msra.mxu0 0.0
    %1563 = vmatprep.subr.mxu0 0.0
    %1564 = vmatpush1.msra.mxu0 0.0
    %1565 = vmatprep.subr.mxu0 0.0
    %1566 = vmatpush1.msra.mxu0 0.0
    %1567 = vmatprep.mubr.f32.mxu0 0.0
    %1568 = vmatmul.mubr.f32.gmra.mrb[0].mxu0 %v1501
    %v1569 = vpop.f32.mrb[0].mxu0
    %v1570 = vadd.f32 0.0, %v1569
    %v1571 = vpop.f32.mrb[0].mxu0
    %1572 = vdwg.mxu0
    %v1573 = vadd.f32 %v1079, %v1570
    %v1574 = vxor.u32 %v1573, 2147483648
    %v1575 = vmul.f32 %v1574, 1.442695
    %v1576 = vpow.pop %v1575
    %v1577 = vadd.f32 %v1576, 1.0
    %v1578 = vrcp.pop %v1577
    %v1579 = vmul.f32 1.0, %v1578
    %v1580 = vtanh.pop %v1573
    %v1582 = vrot.slane %v1490, 6
    %v1584 = vmul.f32 %v1579, %v1582
    %1586 = vrot.lane.b32.xlu0 %v1580, 32
    %v1587 = vpop.permute.xlu0 %1586
    %v1589 = vmul.f32 %v1579, %v1587
    %1591 = vrot.lane.b32.xlu0 %v1589, 32
    %v1592 = vpop.permute.xlu0 %1591
    %v1594 = vadd.f32 %v1584, %v1592
    %v1595 = vtanh.pop %v1594
    %1597 = vrot.lane.b32.xlu0 %v1595, 32
    %v1598 = vpop.permute.xlu0 %1597
    %v1600 = vmul.f32 %v1579, %v1598
    %1602 = vrot.lane.b32.xlu0 %v1600, 64
    %v1603 = vpop.permute.xlu0 %1602
    %v1604 = vsel %vm130, %v1603, 0
    %1606 = vmatprep.subr.mxu0 0.0
    %1607 = vmatpush1.msra.mxu0 %v986
    %1608 = vmatprep.subr.mxu0 0.0
    %1609 = vmatpush1.msra.mxu0 %v987
    %1610 = vmatprep.subr.mxu0 0.0
    %1611 = vmatpush1.msra.mxu0 %v988
    %1612 = vmatprep.subr.mxu0 0.0
    %1613 = vmatpush1.msra.mxu0 %v989
    %1614 = vmatprep.subr.mxu0 0.0
    %1615 = vmatpush1.msra.mxu0 0.0
    %1616 = vmatprep.subr.mxu0 0.0
    %1617 = vmatpush1.msra.mxu0 0.0
    %1618 = vmatprep.subr.mxu0 0.0
    %1619 = vmatpush1.msra.mxu0 0.0
    %1620 = vmatprep.subr.mxu0 0.0
    %1621 = vmatpush1.msra.mxu0 0.0
    %1622 = vmatprep.subr.mxu0 0.0
    %1623 = vmatpush1.msra.mxu0 0.0
    %1624 = vmatprep.subr.mxu0 0.0
    %1625 = vmatpush1.msra.mxu0 0.0
    %1626 = vmatprep.subr.mxu0 0.0
    %1627 = vmatpush1.msra.mxu0 0.0
    %1628 = vmatprep.subr.mxu0 0.0
    %1629 = vmatpush1.msra.mxu0 0.0
    %1630 = vmatprep.subr.mxu0 0.0
    %1631 = vmatpush1.msra.mxu0 0.0
    %1632 = vmatprep.subr.mxu0 0.0
    %1633 = vmatpush1.msra.mxu0 0.0
    %1634 = vmatprep.subr.mxu0 0.0
    %1635 = vmatpush1.msra.mxu0 0.0
    %1636 = vmatprep.subr.mxu0 0.0
    %1637 = vmatpush1.msra.mxu0 0.0
    %1638 = vmatprep.subr.mxu0 0.0
    %1639 = vmatpush1.msra.mxu0 0.0
    %1640 = vmatprep.subr.mxu0 0.0
    %1641 = vmatpush1.msra.mxu0 0.0
    %1642 = vmatprep.subr.mxu0 0.0
    %1643 = vmatpush1.msra.mxu0 0.0
    %1644 = vmatprep.subr.mxu0 0.0
    %1645 = vmatpush1.msra.mxu0 0.0
    %1646 = vmatprep.subr.mxu0 0.0
    %1647 = vmatpush1.msra.mxu0 0.0
    %1648 = vmatprep.subr.mxu0 0.0
    %1649 = vmatpush1.msra.mxu0 0.0
    %1650 = vmatprep.subr.mxu0 0.0
    %1651 = vmatpush1.msra.mxu0 0.0
    %1652 = vmatprep.subr.mxu0 0.0
    %1653 = vmatpush1.msra.mxu0 0.0
    %1654 = vmatprep.subr.mxu0 0.0
    %1655 = vmatpush1.msra.mxu0 0.0
    %1656 = vmatprep.subr.mxu0 0.0
    %1657 = vmatpush1.msra.mxu0 0.0
    %1658 = vmatprep.subr.mxu0 0.0
    %1659 = vmatpush1.msra.mxu0 0.0
    %1660 = vmatprep.subr.mxu0 0.0
    %1661 = vmatpush1.msra.mxu0 0.0
    %1662 = vmatprep.subr.mxu0 0.0
    %1663 = vmatpush1.msra.mxu0 0.0
    %1664 = vmatprep.subr.mxu0 0.0
    %1665 = vmatpush1.msra.mxu0 0.0
    %1666 = vmatprep.subr.mxu0 0.0
    %1667 = vmatpush1.msra.mxu0 0.0
    %1668 = vmatprep.subr.mxu0 0.0
    %1669 = vmatpush1.msra.mxu0 0.0
    %1670 = vmatprep.mubr.f32.mxu0 0.0
    %1671 = vmatmul.mubr.f32.gmra.mrb[0].mxu0 %v1604
    %v1672 = vpop.f32.mrb[0].mxu0
    %v1673 = vadd.f32 0.0, %v1672
    %v1674 = vpop.f32.mrb[0].mxu0
    %1675 = vdwg.mxu0
    %v1677 = vrot.slane %v1673, 6
    %v1679 = vadd.f32 %v1079, %v1677
    %v1680 = vxor.u32 %v1679, 2147483648
    %v1681 = vmul.f32 %v1680, 1.442695
    %v1682 = vpow.pop %v1681
    %v1683 = vadd.f32 %v1682, 1.0
    %v1684 = vrcp.pop %v1683
    %v1685 = vmul.f32 1.0, %v1684
    %v1686 = vtanh.pop %v1679
    %v1688 = vrot.slane %v1594, 6
    %v1690 = vmul.f32 %v1685, %v1688
    %1692 = vrot.lane.b32.xlu0 %v1686, 32
    %v1693 = vpop.permute.xlu0 %1692
    %v1695 = vmul.f32 %v1685, %v1693
    %1697 = vrot.lane.b32.xlu0 %v1695, 32
    %v1698 = vpop.permute.xlu0 %1697
    %v1700 = vadd.f32 %v1690, %v1698
    %v1701 = vtanh.pop %v1700
    %1703 = vrot.lane.b32.xlu0 %v1701, 32
    %v1704 = vpop.permute.xlu0 %1703
    %v1706 = vmul.f32 %v1685, %v1704
    %v1708 = vrot.slane %v1706, 2
    %1709 = vrot.lane.b32.xlu0 %v1708, 64
    %v1710 = vpop.permute.xlu0 %1709
    %v1711 = vsel %vm130, %v1710, 0
    %1713 = vmatprep.subr.mxu0 0.0
    %1714 = vmatpush1.msra.mxu0 %v986
    %1715 = vmatprep.subr.mxu0 0.0
    %1716 = vmatpush1.msra.mxu0 %v987
    %1717 = vmatprep.subr.mxu0 0.0
    %1718 = vmatpush1.msra.mxu0 %v988
    %1719 = vmatprep.subr.mxu0 0.0
    %1720 = vmatpush1.msra.mxu0 %v989
    %1721 = vmatprep.subr.mxu0 0.0
    %1722 = vmatpush1.msra.mxu0 0.0
    %1723 = vmatprep.subr.mxu0 0.0
    %1724 = vmatpush1.msra.mxu0 0.0
    %1725 = vmatprep.subr.mxu0 0.0
    %1726 = vmatpush1.msra.mxu0 0.0
    %1727 = vmatprep.subr.mxu0 0.0
    %1728 = vmatpush1.msra.mxu0 0.0
    %1729 = vmatprep.subr.mxu0 0.0
    %1730 = vmatpush1.msra.mxu0 0.0
    %1731 = vmatprep.subr.mxu0 0.0
    %1732 = vmatpush1.msra.mxu0 0.0
    %1733 = vmatprep.subr.mxu0 0.0
    %1734 = vmatpush1.msra.mxu0 0.0
    %1735 = vmatprep.subr.mxu0 0.0
    %1736 = vmatpush1.msra.mxu0 0.0
    %1737 = vmatprep.subr.mxu0 0.0
    %1738 = vmatpush1.msra.mxu0 0.0
    %1739 = vmatprep.subr.mxu0 0.0
    %1740 = vmatpush1.msra.mxu0 0.0
    %1741 = vmatprep.subr.mxu0 0.0
    %1742 = vmatpush1.msra.mxu0 0.0
    %1743 = vmatprep.subr.mxu0 0.0
    %1744 = vmatpush1.msra.mxu0 0.0
    %1745 = vmatprep.subr.mxu0 0.0
    %1746 = vmatpush1.msra.mxu0 0.0
    %1747 = vmatprep.subr.mxu0 0.0
    %1748 = vmatpush1.msra.mxu0 0.0
    %1749 = vmatprep.subr.mxu0 0.0
    %1750 = vmatpush1.msra.mxu0 0.0
    %1751 = vmatprep.subr.mxu0 0.0
    %1752 = vmatpush1.msra.mxu0 0.0
    %1753 = vmatprep.subr.mxu0 0.0
    %1754 = vmatpush1.msra.mxu0 0.0
    %1755 = vmatprep.subr.mxu0 0.0
    %1756 = vmatpush1.msra.mxu0 0.0
    %1757 = vmatprep.subr.mxu0 0.0
    %1758 = vmatpush1.msra.mxu0 0.0
    %1759 = vmatprep.subr.mxu0 0.0
    %1760 = vmatpush1.msra.mxu0 0.0
    %1761 = vmatprep.subr.mxu0 0.0
    %1762 = vmatpush1.msra.mxu0 0.0
    %1763 = vmatprep.subr.mxu0 0.0
    %1764 = vmatpush1.msra.mxu0 0.0
    %1765 = vmatprep.subr.mxu0 0.0
    %1766 = vmatpush1.msra.mxu0 0.0
    %1767 = vmatprep.subr.mxu0 0.0
    %1768 = vmatpush1.msra.mxu0 0.0
    %1769 = vmatprep.subr.mxu0 0.0
    %1770 = vmatpush1.msra.mxu0 0.0
    %1771 = vmatprep.subr.mxu0 0.0
    %1772 = vmatpush1.msra.mxu0 0.0
    %1773 = vmatprep.subr.mxu0 0.0
    %1774 = vmatpush1.msra.mxu0 0.0
    %1775 = vmatprep.subr.mxu0 0.0
    %1776 = vmatpush1.msra.mxu0 0.0
    %1777 = vmatprep.mubr.f32.mxu0 0.0
    %1778 = vmatmul.mubr.f32.gmra.mrb[0].mxu0 %v1711
    %v1779 = vpop.f32.mrb[0].mxu0
    %v1780 = vadd.f32 0.0, %v1779
    %v1781 = vpop.f32.mrb[0].mxu0
    %1782 = vdwg.mxu0
    %v1784 = vrot.slane %v1780, 4
    %v1786 = vadd.f32 %v1079, %v1784
    %v1787 = vxor.u32 %v1786, 2147483648
    %v1788 = vmul.f32 %v1787, 1.442695
    %v1789 = vpow.pop %v1788
    %v1790 = vadd.f32 %v1789, 1.0
    %v1791 = vrcp.pop %v1790
    %v1792 = vmul.f32 1.0, %v1791
    %v1793 = vtanh.pop %v1786
    %v1795 = vrot.slane %v1700, 6
    %v1797 = vmul.f32 %v1792, %v1795
    %1799 = vrot.lane.b32.xlu0 %v1793, 32
    %v1800 = vpop.permute.xlu0 %1799
    %v1802 = vmul.f32 %v1792, %v1800
    %1804 = vrot.lane.b32.xlu0 %v1802, 32
    %v1805 = vpop.permute.xlu0 %1804
    %v1807 = vadd.f32 %v1797, %v1805
    %v1808 = vtanh.pop %v1807
    %1810 = vrot.lane.b32.xlu0 %v1808, 32
    %v1811 = vpop.permute.xlu0 %1810
    %v1813 = vmul.f32 %v1792, %v1811
    %v1815 = vrot.slane %v1813, 4
    %1816 = vrot.lane.b32.xlu0 %v1815, 64
    %v1817 = vpop.permute.xlu0 %1816
    %v1818 = vsel %vm130, %v1817, 0
    %1820 = vmatprep.subr.mxu0 0.0
    %1821 = vmatpush1.msra.mxu0 %v986
    %1822 = vmatprep.subr.mxu0 0.0
    %1823 = vmatpush1.msra.mxu0 %v987
    %1824 = vmatprep.subr.mxu0 0.0
    %1825 = vmatpush1.msra.mxu0 %v988
    %1826 = vmatprep.subr.mxu0 0.0
    %1827 = vmatpush1.msra.mxu0 %v989
    %1828 = vmatprep.subr.mxu0 0.0
    %1829 = vmatpush1.msra.mxu0 0.0
    %1830 = vmatprep.subr.mxu0 0.0
    %1831 = vmatpush1.msra.mxu0 0.0
    %1832 = vmatprep.subr.mxu0 0.0
    %1833 = vmatpush1.msra.mxu0 0.0
    %1834 = vmatprep.subr.mxu0 0.0
    %1835 = vmatpush1.msra.mxu0 0.0
    %1836 = vmatprep.subr.mxu0 0.0
    %1837 = vmatpush1.msra.mxu0 0.0
    %1838 = vmatprep.subr.mxu0 0.0
    %1839 = vmatpush1.msra.mxu0 0.0
    %1840 = vmatprep.subr.mxu0 0.0
    %1841 = vmatpush1.msra.mxu0 0.0
    %1842 = vmatprep.subr.mxu0 0.0
    %1843 = vmatpush1.msra.mxu0 0.0
    %1844 = vmatprep.subr.mxu0 0.0
    %1845 = vmatpush1.msra.mxu0 0.0
    %1846 = vmatprep.subr.mxu0 0.0
    %1847 = vmatpush1.msra.mxu0 0.0
    %1848 = vmatprep.subr.mxu0 0.0
    %1849 = vmatpush1.msra.mxu0 0.0
    %1850 = vmatprep.subr.mxu0 0.0
    %1851 = vmatpush1.msra.mxu0 0.0
    %1852 = vmatprep.subr.mxu0 0.0
    %1853 = vmatpush1.msra.mxu0 0.0
    %1854 = vmatprep.subr.mxu0 0.0
    %1855 = vmatpush1.msra.mxu0 0.0
    %1856 = vmatprep.subr.mxu0 0.0
    %1857 = vmatpush1.msra.mxu0 0.0
    %1858 = vmatprep.subr.mxu0 0.0
    %1859 = vmatpush1.msra.mxu0 0.0
    %1860 = vmatprep.subr.mxu0 0.0
    %1861 = vmatpush1.msra.mxu0 0.0
    %1862 = vmatprep.subr.mxu0 0.0
    %1863 = vmatpush1.msra.mxu0 0.0
    %1864 = vmatprep.subr.mxu0 0.0
    %1865 = vmatpush1.msra.mxu0 0.0
    %1866 = vmatprep.subr.mxu0 0.0
    %1867 = vmatpush1.msra.mxu0 0.0
    %1868 = vmatprep.subr.mxu0 0.0
    %1869 = vmatpush1.msra.mxu0 0.0
    %1870 = vmatprep.subr.mxu0 0.0
    %1871 = vmatpush1.msra.mxu0 0.0
    %1872 = vmatprep.subr.mxu0 0.0
    %1873 = vmatpush1.msra.mxu0 0.0
    %1874 = vmatprep.subr.mxu0 0.0
    %1875 = vmatpush1.msra.mxu0 0.0
    %1876 = vmatprep.subr.mxu0 0.0
    %1877 = vmatpush1.msra.mxu0 0.0
    %1878 = vmatprep.subr.mxu0 0.0
    %1879 = vmatpush1.msra.mxu0 0.0
    %1880 = vmatprep.subr.mxu0 0.0
    %1881 = vmatpush1.msra.mxu0 0.0
    %1882 = vmatprep.subr.mxu0 0.0
    %1883 = vmatpush1.msra.mxu0 0.0
    %1884 = vmatprep.mubr.f32.mxu0 0.0
    %1885 = vmatmul.mubr.f32.gmra.mrb[0].mxu0 %v1818
    %v1886 = vpop.f32.mrb[0].mxu0
    %v1887 = vadd.f32 0.0, %v1886
    %v1888 = vpop.f32.mrb[0].mxu0
    %1889 = vdwg.mxu0
    %v1891 = vrot.slane %v1887, 2
    %v1893 = vadd.f32 %v1079, %v1891
    %v1894 = vxor.u32 %v1893, 2147483648
    %v1895 = vmul.f32 %v1894, 1.442695
    %v1896 = vpow.pop %v1895
    %v1897 = vadd.f32 %v1896, 1.0
    %v1898 = vrcp.pop %v1897
    %v1899 = vmul.f32 1.0, %v1898
    %v1900 = vtanh.pop %v1893
    %v1902 = vrot.slane %v1807, 6
    %v1904 = vmul.f32 %v1899, %v1902
    %1906 = vrot.lane.b32.xlu0 %v1900, 32
    %v1907 = vpop.permute.xlu0 %1906
    %v1909 = vmul.f32 %v1899, %v1907
    %1911 = vrot.lane.b32.xlu0 %v1909, 32
    %v1912 = vpop.permute.xlu0 %1911
    %v1914 = vadd.f32 %v1904, %v1912
    %v1915 = vtanh.pop %v1914
    %1917 = vrot.lane.b32.xlu0 %v1915, 32
    %v1918 = vpop.permute.xlu0 %1917
    %v1920 = vmul.f32 %v1899, %v1918
    %1922 = vrot.lane.b32.xlu0 %v1284, 96
    %v1923 = vpop.permute.xlu0 %1922
    %1926 = vrot.lane.b32.xlu0 %v1498, 32
    %v1927 = vpop.permute.xlu0 %1926
    %1930 = vrot.lane.b32.xlu0 %v1708, 96
    %v1931 = vpop.permute.xlu0 %1930
    %v1935 = vrot.slane %v1920, 6
    %1936 = vrot.lane.b32.xlu0 %v1935, 32
    %v1937 = vpop.permute.xlu0 %1936
    %v1939 = vsel %vm130, %v1179, %v1923
    %vm1940 = vcmask 523264
    %v1941 = vsel %vm1940, %v1939, %v1391
    %vm1942 = vcmask 785408
    %v1943 = vsel %vm1942, %v1941, %v1927
    %v1944 = vsel %vm130, %v1603, %v1931
    %v1945 = vsel %vm1940, %v1944, %v1815
    %v1946 = vsel %vm1942, %v1945, %v1937
    %1948 = vrot.lane.b32.xlu0 %v1943, 124
    %v1949 = vpop.permute.xlu0 %1948
    %1951 = vrot.lane.b32.xlu0 %v1943, 120
    %v1952 = vpop.permute.xlu0 %1951
    %1954 = vrot.lane.b32.xlu0 %v1943, 116
    %v1955 = vpop.permute.xlu0 %1954
    %1957 = vrot.lane.b32.xlu0 %v1943, 112
    %v1958 = vpop.permute.xlu0 %1957
    %1960 = vrot.lane.b32.xlu0 %v1943, 108
    %v1961 = vpop.permute.xlu0 %1960
    %1963 = vrot.lane.b32.xlu0 %v1943, 104
    %v1964 = vpop.permute.xlu0 %1963
    %1966 = vrot.lane.b32.xlu0 %v1943, 100
    %v1967 = vpop.permute.xlu0 %1966
    %1969 = vrot.lane.b32.xlu0 %v1943, 96
    %v1970 = vpop.permute.xlu0 %1969
    %1972 = vrot.lane.b32.xlu0 %v1943, 92
    %v1973 = vpop.permute.xlu0 %1972
    %1975 = vrot.lane.b32.xlu0 %v1943, 88
    %v1976 = vpop.permute.xlu0 %1975
    %1978 = vrot.lane.b32.xlu0 %v1943, 84
    %v1979 = vpop.permute.xlu0 %1978
    %1981 = vrot.lane.b32.xlu0 %v1943, 80
    %v1982 = vpop.permute.xlu0 %1981
    %1984 = vrot.lane.b32.xlu0 %v1943, 76
    %v1985 = vpop.permute.xlu0 %1984
    %1987 = vrot.lane.b32.xlu0 %v1943, 72
    %v1988 = vpop.permute.xlu0 %1987
    %1990 = vrot.lane.b32.xlu0 %v1943, 68
    %v1991 = vpop.permute.xlu0 %1990
    %1993 = vrot.lane.b32.xlu0 %v1943, 64
    %v1994 = vpop.permute.xlu0 %1993
    %1996 = vrot.lane.b32.xlu0 %v1943, 60
    %v1997 = vpop.permute.xlu0 %1996
    %1999 = vrot.lane.b32.xlu0 %v1943, 56
    %v2000 = vpop.permute.xlu0 %1999
    %2002 = vrot.lane.b32.xlu0 %v1943, 52
    %v2003 = vpop.permute.xlu0 %2002
    %2005 = vrot.lane.b32.xlu0 %v1943, 48
    %v2006 = vpop.permute.xlu0 %2005
    %2008 = vrot.lane.b32.xlu0 %v1943, 44
    %v2009 = vpop.permute.xlu0 %2008
    %2011 = vrot.lane.b32.xlu0 %v1943, 40
    %v2012 = vpop.permute.xlu0 %2011
    %2014 = vrot.lane.b32.xlu0 %v1943, 36
    %v2015 = vpop.permute.xlu0 %2014
    %2017 = vrot.lane.b32.xlu0 %v1943, 32
    %v2018 = vpop.permute.xlu0 %2017
    %2020 = vrot.lane.b32.xlu0 %v1943, 28
    %v2021 = vpop.permute.xlu0 %2020
    %2023 = vrot.lane.b32.xlu0 %v1943, 24
    %v2024 = vpop.permute.xlu0 %2023
    %2026 = vrot.lane.b32.xlu0 %v1943, 20
    %v2027 = vpop.permute.xlu0 %2026
    %2029 = vrot.lane.b32.xlu0 %v1943, 16
    %v2030 = vpop.permute.xlu0 %2029
    %2032 = vrot.lane.b32.xlu0 %v1943, 12
    %v2033 = vpop.permute.xlu0 %2032
    %2035 = vrot.lane.b32.xlu0 %v1943, 8
    %v2036 = vpop.permute.xlu0 %2035
    %2038 = vrot.lane.b32.xlu0 %v1943, 4
    %v2039 = vpop.permute.xlu0 %2038
    %2042 = vrot.lane.b32.xlu0 %v1946, 124
    %v2043 = vpop.permute.xlu0 %2042
    %2045 = vrot.lane.b32.xlu0 %v1946, 120
    %v2046 = vpop.permute.xlu0 %2045
    %2048 = vrot.lane.b32.xlu0 %v1946, 116
    %v2049 = vpop.permute.xlu0 %2048
    %2051 = vrot.lane.b32.xlu0 %v1946, 112
    %v2052 = vpop.permute.xlu0 %2051
    %2054 = vrot.lane.b32.xlu0 %v1946, 108
    %v2055 = vpop.permute.xlu0 %2054
    %2057 = vrot.lane.b32.xlu0 %v1946, 104
    %v2058 = vpop.permute.xlu0 %2057
    %2060 = vrot.lane.b32.xlu0 %v1946, 100
    %v2061 = vpop.permute.xlu0 %2060
    %2063 = vrot.lane.b32.xlu0 %v1946, 96
    %v2064 = vpop.permute.xlu0 %2063
    %2066 = vrot.lane.b32.xlu0 %v1946, 92
    %v2067 = vpop.permute.xlu0 %2066
    %2069 = vrot.lane.b32.xlu0 %v1946, 88
    %v2070 = vpop.permute.xlu0 %2069
    %2072 = vrot.lane.b32.xlu0 %v1946, 84
    %v2073 = vpop.permute.xlu0 %2072
    %2075 = vrot.lane.b32.xlu0 %v1946, 80
    %v2076 = vpop.permute.xlu0 %2075
    %2078 = vrot.lane.b32.xlu0 %v1946, 76
    %v2079 = vpop.permute.xlu0 %2078
    %2081 = vrot.lane.b32.xlu0 %v1946, 72
    %v2082 = vpop.permute.xlu0 %2081
    %2084 = vrot.lane.b32.xlu0 %v1946, 68
    %v2085 = vpop.permute.xlu0 %2084
    %2087 = vrot.lane.b32.xlu0 %v1946, 64
    %v2088 = vpop.permute.xlu0 %2087
    %2090 = vrot.lane.b32.xlu0 %v1946, 60
    %v2091 = vpop.permute.xlu0 %2090
    %2093 = vrot.lane.b32.xlu0 %v1946, 56
    %v2094 = vpop.permute.xlu0 %2093
    %2096 = vrot.lane.b32.xlu0 %v1946, 52
    %v2097 = vpop.permute.xlu0 %2096
    %2099 = vrot.lane.b32.xlu0 %v1946, 48
    %v2100 = vpop.permute.xlu0 %2099
    %2102 = vrot.lane.b32.xlu0 %v1946, 44
    %v2103 = vpop.permute.xlu0 %2102
    %2105 = vrot.lane.b32.xlu0 %v1946, 40
    %v2106 = vpop.permute.xlu0 %2105
    %2108 = vrot.lane.b32.xlu0 %v1946, 36
    %v2109 = vpop.permute.xlu0 %2108
    %2111 = vrot.lane.b32.xlu0 %v1946, 32
    %v2112 = vpop.permute.xlu0 %2111
    %2114 = vrot.lane.b32.xlu0 %v1946, 28
    %v2115 = vpop.permute.xlu0 %2114
    %2117 = vrot.lane.b32.xlu0 %v1946, 24
    %v2118 = vpop.permute.xlu0 %2117
    %2120 = vrot.lane.b32.xlu0 %v1946, 20
    %v2121 = vpop.permute.xlu0 %2120
    %2123 = vrot.lane.b32.xlu0 %v1946, 16
    %v2124 = vpop.permute.xlu0 %2123
    %2126 = vrot.lane.b32.xlu0 %v1946, 12
    %v2127 = vpop.permute.xlu0 %2126
    %2129 = vrot.lane.b32.xlu0 %v1946, 8
    %v2130 = vpop.permute.xlu0 %2129
    %2132 = vrot.lane.b32.xlu0 %v1946, 4
    %v2133 = vpop.permute.xlu0 %2132
    %v2135 = vcombine.low %v1943, %v1952
    %v2137 = vunpack.c.l.s4 1983009808
    %v2138 = vunpack.c.0.s8 %v2137
    %v2139 = vlaneseq
    %v2140 = vshrl.u32 %v2139, 7
    %v2141 = vsub.s32 %v2138, %v2140
    %v2142 = vrot.slane %v2135, %v2141
    %v2143 = vcombine.low %v1949, %v1955
    %v2145 = vunpack.c.l.s4 1983009808
    %v2146 = vunpack.c.0.s8 %v2145
    %v2147 = vlaneseq
    %v2148 = vshrl.u32 %v2147, 7
    %v2149 = vsub.s32 %v2146, %v2148
    %v2150 = vrot.slane %v2143, %v2149
    %v2151 = vcombine.low %v1958, %v1964
    %v2153 = vunpack.c.l.s4 1983009808
    %v2154 = vunpack.c.0.s8 %v2153
    %v2155 = vlaneseq
    %v2156 = vshrl.u32 %v2155, 7
    %v2157 = vsub.s32 %v2154, %v2156
    %v2158 = vrot.slane %v2151, %v2157
    %v2159 = vcombine.low %v1961, %v1967
    %v2161 = vunpack.c.l.s4 1983009808
    %v2162 = vunpack.c.0.s8 %v2161
    %v2163 = vlaneseq
    %v2164 = vshrl.u32 %v2163, 7
    %v2165 = vsub.s32 %v2162, %v2164
    %v2166 = vrot.slane %v2159, %v2165
    %v2167 = vcombine.low %v2142, %v2150
    %v2169 = vunpack.c.l.s4 1934713408
    %v2170 = vunpack.c.0.s8 %v2169
    %v2171 = vlaneseq
    %v2172 = vshrl.u32 %v2171, 7
    %v2173 = vsub.s32 %v2170, %v2172
    %v2174 = vrot.slane %v2167, %v2173
    %v2175 = vcombine.low %v2158, %v2166
    %v2177 = vunpack.c.l.s4 1934713408
    %v2178 = vunpack.c.0.s8 %v2177
    %v2179 = vlaneseq
    %v2180 = vshrl.u32 %v2179, 7
    %v2181 = vsub.s32 %v2178, %v2180
    %v2182 = vrot.slane %v2175, %v2181
    %v2183 = vcombine.low %v2174, %v2182
    %v2184 = vcombine.high %v2174, %v2182
    %v2185 = vcombine.low %v1970, %v1976
    %v2187 = vunpack.c.l.s4 1983009808
    %v2188 = vunpack.c.0.s8 %v2187
    %v2189 = vlaneseq
    %v2190 = vshrl.u32 %v2189, 7
    %v2191 = vsub.s32 %v2188, %v2190
    %v2192 = vrot.slane %v2185, %v2191
    %v2193 = vcombine.low %v1973, %v1979
    %v2195 = vunpack.c.l.s4 1983009808
    %v2196 = vunpack.c.0.s8 %v2195
    %v2197 = vlaneseq
    %v2198 = vshrl.u32 %v2197, 7
    %v2199 = vsub.s32 %v2196, %v2198
    %v2200 = vrot.slane %v2193, %v2199
    %v2201 = vcombine.low %v1982, %v1988
    %v2203 = vunpack.c.l.s4 1983009808
    %v2204 = vunpack.c.0.s8 %v2203
    %v2205 = vlaneseq
    %v2206 = vshrl.u32 %v2205, 7
    %v2207 = vsub.s32 %v2204, %v2206
    %v2208 = vrot.slane %v2201, %v2207
    %v2209 = vcombine.low %v1985, %v1991
    %v2211 = vunpack.c.l.s4 1983009808
    %v2212 = vunpack.c.0.s8 %v2211
    %v2213 = vlaneseq
    %v2214 = vshrl.u32 %v2213, 7
    %v2215 = vsub.s32 %v2212, %v2214
    %v2216 = vrot.slane %v2209, %v2215
    %v2217 = vcombine.low %v2192, %v2200
    %v2219 = vunpack.c.l.s4 1934713408
    %v2220 = vunpack.c.0.s8 %v2219
    %v2221 = vlaneseq
    %v2222 = vshrl.u32 %v2221, 7
    %v2223 = vsub.s32 %v2220, %v2222
    %v2224 = vrot.slane %v2217, %v2223
    %v2225 = vcombine.low %v2208, %v2216
    %v2227 = vunpack.c.l.s4 1934713408
    %v2228 = vunpack.c.0.s8 %v2227
    %v2229 = vlaneseq
    %v2230 = vshrl.u32 %v2229, 7
    %v2231 = vsub.s32 %v2228, %v2230
    %v2232 = vrot.slane %v2225, %v2231
    %v2233 = vcombine.low %v2224, %v2232
    %v2234 = vcombine.high %v2224, %v2232
    %v2235 = vcombine.low %v1994, %v2000
    %v2237 = vunpack.c.l.s4 1983009808
    %v2238 = vunpack.c.0.s8 %v2237
    %v2239 = vlaneseq
    %v2240 = vshrl.u32 %v2239, 7
    %v2241 = vsub.s32 %v2238, %v2240
    %v2242 = vrot.slane %v2235, %v2241
    %v2243 = vcombine.low %v1997, %v2003
    %v2245 = vunpack.c.l.s4 1983009808
    %v2246 = vunpack.c.0.s8 %v2245
    %v2247 = vlaneseq
    %v2248 = vshrl.u32 %v2247, 7
    %v2249 = vsub.s32 %v2246, %v2248
    %v2250 = vrot.slane %v2243, %v2249
    %v2251 = vcombine.low %v2006, %v2012
    %v2253 = vunpack.c.l.s4 1983009808
    %v2254 = vunpack.c.0.s8 %v2253
    %v2255 = vlaneseq
    %v2256 = vshrl.u32 %v2255, 7
    %v2257 = vsub.s32 %v2254, %v2256
    %v2258 = vrot.slane %v2251, %v2257
    %v2259 = vcombine.low %v2009, %v2015
    %v2261 = vunpack.c.l.s4 1983009808
    %v2262 = vunpack.c.0.s8 %v2261
    %v2263 = vlaneseq
    %v2264 = vshrl.u32 %v2263, 7
    %v2265 = vsub.s32 %v2262, %v2264
    %v2266 = vrot.slane %v2259, %v2265
    %v2267 = vcombine.low %v2242, %v2250
    %v2269 = vunpack.c.l.s4 1934713408
    %v2270 = vunpack.c.0.s8 %v2269
    %v2271 = vlaneseq
    %v2272 = vshrl.u32 %v2271, 7
    %v2273 = vsub.s32 %v2270, %v2272
    %v2274 = vrot.slane %v2267, %v2273
    %v2275 = vcombine.low %v2258, %v2266
    %v2277 = vunpack.c.l.s4 1934713408
    %v2278 = vunpack.c.0.s8 %v2277
    %v2279 = vlaneseq
    %v2280 = vshrl.u32 %v2279, 7
    %v2281 = vsub.s32 %v2278, %v2280
    %v2282 = vrot.slane %v2275, %v2281
    %v2283 = vcombine.low %v2274, %v2282
    %v2284 = vcombine.high %v2274, %v2282
    %v2285 = vcombine.low %v2018, %v2024
    %v2287 = vunpack.c.l.s4 1983009808
    %v2288 = vunpack.c.0.s8 %v2287
    %v2289 = vlaneseq
    %v2290 = vshrl.u32 %v2289, 7
    %v2291 = vsub.s32 %v2288, %v2290
    %v2292 = vrot.slane %v2285, %v2291
    %v2293 = vcombine.low %v2021, %v2027
    %v2295 = vunpack.c.l.s4 1983009808
    %v2296 = vunpack.c.0.s8 %v2295
    %v2297 = vlaneseq
    %v2298 = vshrl.u32 %v2297, 7
    %v2299 = vsub.s32 %v2296, %v2298
    %v2300 = vrot.slane %v2293, %v2299
    %v2301 = vcombine.low %v2030, %v2036
    %v2303 = vunpack.c.l.s4 1983009808
    %v2304 = vunpack.c.0.s8 %v2303
    %v2305 = vlaneseq
    %v2306 = vshrl.u32 %v2305, 7
    %v2307 = vsub.s32 %v2304, %v2306
    %v2308 = vrot.slane %v2301, %v2307
    %v2309 = vcombine.low %v2033, %v2039
    %v2311 = vunpack.c.l.s4 1983009808
    %v2312 = vunpack.c.0.s8 %v2311
    %v2313 = vlaneseq
    %v2314 = vshrl.u32 %v2313, 7
    %v2315 = vsub.s32 %v2312, %v2314
    %v2316 = vrot.slane %v2309, %v2315
    %v2317 = vcombine.low %v2292, %v2300
    %v2319 = vunpack.c.l.s4 1934713408
    %v2320 = vunpack.c.0.s8 %v2319
    %v2321 = vlaneseq
    %v2322 = vshrl.u32 %v2321, 7
    %v2323 = vsub.s32 %v2320, %v2322
    %v2324 = vrot.slane %v2317, %v2323
    %v2325 = vcombine.low %v2308, %v2316
    %v2327 = vunpack.c.l.s4 1934713408
    %v2328 = vunpack.c.0.s8 %v2327
    %v2329 = vlaneseq
    %v2330 = vshrl.u32 %v2329, 7
    %v2331 = vsub.s32 %v2328, %v2330
    %v2332 = vrot.slane %v2325, %v2331
    %v2333 = vcombine.low %v2324, %v2332
    %v2334 = vcombine.high %v2324, %v2332
    %v2335 = vcombine.low %v1946, %v2046
    %v2337 = vunpack.c.l.s4 1983009808
    %v2338 = vunpack.c.0.s8 %v2337
    %v2339 = vlaneseq
    %v2340 = vshrl.u32 %v2339, 7
    %v2341 = vsub.s32 %v2338, %v2340
    %v2342 = vrot.slane %v2335, %v2341
    %v2343 = vcombine.low %v2043, %v2049
    %v2345 = vunpack.c.l.s4 1983009808
    %v2346 = vunpack.c.0.s8 %v2345
    %v2347 = vlaneseq
    %v2348 = vshrl.u32 %v2347, 7
    %v2349 = vsub.s32 %v2346, %v2348
    %v2350 = vrot.slane %v2343, %v2349
    %v2351 = vcombine.low %v2052, %v2058
    %v2353 = vunpack.c.l.s4 1983009808
    %v2354 = vunpack.c.0.s8 %v2353
    %v2355 = vlaneseq
    %v2356 = vshrl.u32 %v2355, 7
    %v2357 = vsub.s32 %v2354, %v2356
    %v2358 = vrot.slane %v2351, %v2357
    %v2359 = vcombine.low %v2055, %v2061
    %v2361 = vunpack.c.l.s4 1983009808
    %v2362 = vunpack.c.0.s8 %v2361
    %v2363 = vlaneseq
    %v2364 = vshrl.u32 %v2363, 7
    %v2365 = vsub.s32 %v2362, %v2364
    %v2366 = vrot.slane %v2359, %v2365
    %v2367 = vcombine.low %v2342, %v2350
    %v2369 = vunpack.c.l.s4 1934713408
    %v2370 = vunpack.c.0.s8 %v2369
    %v2371 = vlaneseq
    %v2372 = vshrl.u32 %v2371, 7
    %v2373 = vsub.s32 %v2370, %v2372
    %v2374 = vrot.slane %v2367, %v2373
    %v2375 = vcombine.low %v2358, %v2366
    %v2377 = vunpack.c.l.s4 1934713408
    %v2378 = vunpack.c.0.s8 %v2377
    %v2379 = vlaneseq
    %v2380 = vshrl.u32 %v2379, 7
    %v2381 = vsub.s32 %v2378, %v2380
    %v2382 = vrot.slane %v2375, %v2381
    %v2383 = vcombine.low %v2374, %v2382
    %v2384 = vcombine.high %v2374, %v2382
    %v2385 = vcombine.low %v2064, %v2070
    %v2387 = vunpack.c.l.s4 1983009808
    %v2388 = vunpack.c.0.s8 %v2387
    %v2389 = vlaneseq
    %v2390 = vshrl.u32 %v2389, 7
    %v2391 = vsub.s32 %v2388, %v2390
    %v2392 = vrot.slane %v2385, %v2391
    %v2393 = vcombine.low %v2067, %v2073
    %v2395 = vunpack.c.l.s4 1983009808
    %v2396 = vunpack.c.0.s8 %v2395
    %v2397 = vlaneseq
    %v2398 = vshrl.u32 %v2397, 7
    %v2399 = vsub.s32 %v2396, %v2398
    %v2400 = vrot.slane %v2393, %v2399
    %v2401 = vcombine.low %v2076, %v2082
    %v2403 = vunpack.c.l.s4 1983009808
    %v2404 = vunpack.c.0.s8 %v2403
    %v2405 = vlaneseq
    %v2406 = vshrl.u32 %v2405, 7
    %v2407 = vsub.s32 %v2404, %v2406
    %v2408 = vrot.slane %v2401, %v2407
    %v2409 = vcombine.low %v2079, %v2085
    %v2411 = vunpack.c.l.s4 1983009808
    %v2412 = vunpack.c.0.s8 %v2411
    %v2413 = vlaneseq
    %v2414 = vshrl.u32 %v2413, 7
    %v2415 = vsub.s32 %v2412, %v2414
    %v2416 = vrot.slane %v2409, %v2415
    %v2417 = vcombine.low %v2392, %v2400
    %v2419 = vunpack.c.l.s4 1934713408
    %v2420 = vunpack.c.0.s8 %v2419
    %v2421 = vlaneseq
    %v2422 = vshrl.u32 %v2421, 7
    %v2423 = vsub.s32 %v2420, %v2422
    %v2424 = vrot.slane %v2417, %v2423
    %v2425 = vcombine.low %v2408, %v2416
    %v2427 = vunpack.c.l.s4 1934713408
    %v2428 = vunpack.c.0.s8 %v2427
    %v2429 = vlaneseq
    %v2430 = vshrl.u32 %v2429, 7
    %v2431 = vsub.s32 %v2428, %v2430
    %v2432 = vrot.slane %v2425, %v2431
    %v2433 = vcombine.low %v2424, %v2432
    %v2434 = vcombine.high %v2424, %v2432
    %v2435 = vcombine.low %v2088, %v2094
    %v2437 = vunpack.c.l.s4 1983009808
    %v2438 = vunpack.c.0.s8 %v2437
    %v2439 = vlaneseq
    %v2440 = vshrl.u32 %v2439, 7
    %v2441 = vsub.s32 %v2438, %v2440
    %v2442 = vrot.slane %v2435, %v2441
    %v2443 = vcombine.low %v2091, %v2097
    %v2445 = vunpack.c.l.s4 1983009808
    %v2446 = vunpack.c.0.s8 %v2445
    %v2447 = vlaneseq
    %v2448 = vshrl.u32 %v2447, 7
    %v2449 = vsub.s32 %v2446, %v2448
    %v2450 = vrot.slane %v2443, %v2449
    %v2451 = vcombine.low %v2100, %v2106
    %v2453 = vunpack.c.l.s4 1983009808
    %v2454 = vunpack.c.0.s8 %v2453
    %v2455 = vlaneseq
    %v2456 = vshrl.u32 %v2455, 7
    %v2457 = vsub.s32 %v2454, %v2456
    %v2458 = vrot.slane %v2451, %v2457
    %v2459 = vcombine.low %v2103, %v2109
    %v2461 = vunpack.c.l.s4 1983009808
    %v2462 = vunpack.c.0.s8 %v2461
    %v2463 = vlaneseq
    %v2464 = vshrl.u32 %v2463, 7
    %v2465 = vsub.s32 %v2462, %v2464
    %v2466 = vrot.slane %v2459, %v2465
    %v2467 = vcombine.low %v2442, %v2450
    %v2469 = vunpack.c.l.s4 1934713408
    %v2470 = vunpack.c.0.s8 %v2469
    %v2471 = vlaneseq
    %v2472 = vshrl.u32 %v2471, 7
    %v2473 = vsub.s32 %v2470, %v2472
    %v2474 = vrot.slane %v2467, %v2473
    %v2475 = vcombine.low %v2458, %v2466
    %v2477 = vunpack.c.l.s4 1934713408
    %v2478 = vunpack.c.0.s8 %v2477
    %v2479 = vlaneseq
    %v2480 = vshrl.u32 %v2479, 7
    %v2481 = vsub.s32 %v2478, %v2480
    %v2482 = vrot.slane %v2475, %v2481
    %v2483 = vcombine.low %v2474, %v2482
    %v2484 = vcombine.high %v2474, %v2482
    %v2485 = vcombine.low %v2112, %v2118
    %v2487 = vunpack.c.l.s4 1983009808
    %v2488 = vunpack.c.0.s8 %v2487
    %v2489 = vlaneseq
    %v2490 = vshrl.u32 %v2489, 7
    %v2491 = vsub.s32 %v2488, %v2490
    %v2492 = vrot.slane %v2485, %v2491
    %v2493 = vcombine.low %v2115, %v2121
    %v2495 = vunpack.c.l.s4 1983009808
    %v2496 = vunpack.c.0.s8 %v2495
    %v2497 = vlaneseq
    %v2498 = vshrl.u32 %v2497, 7
    %v2499 = vsub.s32 %v2496, %v2498
    %v2500 = vrot.slane %v2493, %v2499
    %v2501 = vcombine.low %v2124, %v2130
    %v2503 = vunpack.c.l.s4 1983009808
    %v2504 = vunpack.c.0.s8 %v2503
    %v2505 = vlaneseq
    %v2506 = vshrl.u32 %v2505, 7
    %v2507 = vsub.s32 %v2504, %v2506
    %v2508 = vrot.slane %v2501, %v2507
    %v2509 = vcombine.low %v2127, %v2133
    %v2511 = vunpack.c.l.s4 1983009808
    %v2512 = vunpack.c.0.s8 %v2511
    %v2513 = vlaneseq
    %v2514 = vshrl.u32 %v2513, 7
    %v2515 = vsub.s32 %v2512, %v2514
    %v2516 = vrot.slane %v2509, %v2515
    %v2517 = vcombine.low %v2492, %v2500
    %v2519 = vunpack.c.l.s4 1934713408
    %v2520 = vunpack.c.0.s8 %v2519
    %v2521 = vlaneseq
    %v2522 = vshrl.u32 %v2521, 7
    %v2523 = vsub.s32 %v2520, %v2522
    %v2524 = vrot.slane %v2517, %v2523
    %v2525 = vcombine.low %v2508, %v2516
    %v2527 = vunpack.c.l.s4 1934713408
    %v2528 = vunpack.c.0.s8 %v2527
    %v2529 = vlaneseq
    %v2530 = vshrl.u32 %v2529, 7
    %v2531 = vsub.s32 %v2528, %v2530
    %v2532 = vrot.slane %v2525, %v2531
    %v2533 = vcombine.low %v2524, %v2532
    %v2534 = vcombine.high %v2524, %v2532
    %vm2535 = vcmask 31744
    %v2536 = vsel %vm2535, %v2183, -inf
    %2537 = vmax.xlane.f32.xlu0 %v2536
    %v2538 = vpop.xlane.xlu0 %2537
    %v2539 = vsel %vm2535, %v2233, -inf
    %2540 = vmax.xlane.f32.xlu0 %v2539
    %v2541 = vpop.xlane.xlu0 %2540
    %v2542 = vsel %vm2535, %v2283, -inf
    %2543 = vmax.xlane.f32.xlu0 %v2542
    %v2544 = vpop.xlane.xlu0 %2543
    %v2545 = vsel %vm2535, %v2333, -inf
    %2546 = vmax.xlane.f32.xlu0 %v2545
    %v2547 = vpop.xlane.xlu0 %2546
    %v2548 = vsel %vm2535, %v2383, -inf
    %2549 = vmax.xlane.f32.xlu0 %v2548
    %v2550 = vpop.xlane.xlu0 %2549
    %v2551 = vsel %vm2535, %v2433, -inf
    %2552 = vmax.xlane.f32.xlu0 %v2551
    %v2553 = vpop.xlane.xlu0 %2552
    %v2554 = vsel %vm2535, %v2483, -inf
    %2555 = vmax.xlane.f32.xlu0 %v2554
    %v2556 = vpop.xlane.xlu0 %2555
    %v2557 = vsel %vm2535, %v2533, -inf
    %2558 = vmax.xlane.f32.xlu0 %v2557
    %v2559 = vpop.xlane.xlu0 %2558
    %v2560 = vsel %vm2535, %v2184, -inf
    %2561 = vmax.xlane.f32.xlu0 %v2560
    %v2562 = vpop.xlane.xlu0 %2561
    %v2563 = vsel %vm2535, %v2234, -inf
    %2564 = vmax.xlane.f32.xlu0 %v2563
    %v2565 = vpop.xlane.xlu0 %2564
    %v2566 = vsel %vm2535, %v2284, -inf
    %2567 = vmax.xlane.f32.xlu0 %v2566
    %v2568 = vpop.xlane.xlu0 %2567
    %v2569 = vsel %vm2535, %v2334, -inf
    %2570 = vmax.xlane.f32.xlu0 %v2569
    %v2571 = vpop.xlane.xlu0 %2570
    %v2572 = vsel %vm2535, %v2384, -inf
    %2573 = vmax.xlane.f32.xlu0 %v2572
    %v2574 = vpop.xlane.xlu0 %2573
    %v2575 = vsel %vm2535, %v2434, -inf
    %2576 = vmax.xlane.f32.xlu0 %v2575
    %v2577 = vpop.xlane.xlu0 %2576
    %v2578 = vsel %vm2535, %v2484, -inf
    %2579 = vmax.xlane.f32.xlu0 %v2578
    %v2580 = vpop.xlane.xlu0 %2579
    %v2581 = vsel %vm2535, %v2534, -inf
    %2582 = vmax.xlane.f32.xlu0 %v2581
    %v2583 = vpop.xlane.xlu0 %2582
    %v2584 = vld [vmem:[%s7] sm:$0xff]
    %v2585 = vld [vmem:[%s7 + $0x8] sm:$0xff]
    %v2586 = vld [vmem:[%s7 + $0x10] sm:$0xff]
    %v2587 = vld [vmem:[%s7 + $0x18] sm:$0xff]
    %v2588 = vld [vmem:[%s7 + $0x20] sm:$0xff]
    %v2589 = vld [vmem:[%s7 + $0x28] sm:$0xff]
    %v2590 = vld [vmem:[%s7 + $0x30] sm:$0xff]
    %v2591 = vld [vmem:[%s7 + $0x38] sm:$0xff]
    %v2592 = vld [vmem:[%s8] sm:$0x1]
    %v2594 = vlaneseq
    %v2595 = vshrl.u32 %v2594, 7
    %v2596 = vsub.s32 0, %v2595
    %v2597 = vrot.slane %v2592, %v2596
    %v2615 = vlaneseq
    %v2616 = vand.u32 %v2615, 127
    %v2617 = vlaneseq
    %v2618 = vshrl.u32 %v2617, 7
    %v2619 = vsub.s32 %v2616, %v2618
    %v2620 = vrot.slane %v2538, %v2619
    %v2621 = vadd.s32 %v2616, 4294967288
    %v2622 = vlaneseq
    %v2623 = vshrl.u32 %v2622, 7
    %v2624 = vsub.s32 %v2621, %v2623
    %v2625 = vrot.slane %v2541, %v2624
    %vm2626 = vcmask 130112
    %v2627 = vsel %vm2626, %v2625, %v2620
    %v2628 = vadd.s32 %v2616, 4294967280
    %v2629 = vlaneseq
    %v2630 = vshrl.u32 %v2629, 7
    %v2631 = vsub.s32 %v2628, %v2630
    %v2632 = vrot.slane %v2544, %v2631
    %vm2633 = vcmask 195712
    %v2634 = vsel %vm2633, %v2632, %v2627
    %v2635 = vadd.s32 %v2616, 4294967272
    %v2636 = vlaneseq
    %v2637 = vshrl.u32 %v2636, 7
    %v2638 = vsub.s32 %v2635, %v2637
    %v2639 = vrot.slane %v2547, %v2638
    %vm2640 = vcmask 261312
    %v2641 = vsel %vm2640, %v2639, %v2634
    %v2642 = vadd.s32 %v2616, 4294967264
    %v2643 = vlaneseq
    %v2644 = vshrl.u32 %v2643, 7
    %v2645 = vsub.s32 %v2642, %v2644
    %v2646 = vrot.slane %v2550, %v2645
    %vm2647 = vcmask 326912
    %v2648 = vsel %vm2647, %v2646, %v2641
    %v2649 = vadd.s32 %v2616, 4294967256
    %v2650 = vlaneseq
    %v2651 = vshrl.u32 %v2650, 7
    %v2652 = vsub.s32 %v2649, %v2651
    %v2653 = vrot.slane %v2553, %v2652
    %vm2654 = vcmask 392512
    %v2655 = vsel %vm2654, %v2653, %v2648
    %v2656 = vadd.s32 %v2616, 4294967248
    %v2657 = vlaneseq
    %v2658 = vshrl.u32 %v2657, 7
    %v2659 = vsub.s32 %v2656, %v2658
    %v2660 = vrot.slane %v2556, %v2659
    %vm2661 = vcmask 458112
    %v2662 = vsel %vm2661, %v2660, %v2655
    %v2663 = vadd.s32 %v2616, 4294967240
    %v2664 = vlaneseq
    %v2665 = vshrl.u32 %v2664, 7
    %v2666 = vsub.s32 %v2663, %v2665
    %v2667 = vrot.slane %v2559, %v2666
    %vm2668 = vcmask 523712
    %v2669 = vsel %vm2668, %v2667, %v2662
    %v2670 = vlaneseq
    %v2671 = vshrl.u32 %v2670, 7
    %v2672 = vsub.s32 %v2616, %v2671
    %v2673 = vrot.slane %v2562, %v2672
    %v2674 = vlaneseq
    %v2675 = vshrl.u32 %v2674, 7
    %v2676 = vsub.s32 %v2621, %v2675
    %v2677 = vrot.slane %v2565, %v2676
    %v2678 = vsel %vm2626, %v2677, %v2673
    %v2679 = vlaneseq
    %v2680 = vshrl.u32 %v2679, 7
    %v2681 = vsub.s32 %v2628, %v2680
    %v2682 = vrot.slane %v2568, %v2681
    %v2683 = vsel %vm2633, %v2682, %v2678
    %v2684 = vlaneseq
    %v2685 = vshrl.u32 %v2684, 7
    %v2686 = vsub.s32 %v2635, %v2685
    %v2687 = vrot.slane %v2571, %v2686
    %v2688 = vsel %vm2640, %v2687, %v2683
    %v2689 = vlaneseq
    %v2690 = vshrl.u32 %v2689, 7
    %v2691 = vsub.s32 %v2642, %v2690
    %v2692 = vrot.slane %v2574, %v2691
    %v2693 = vsel %vm2647, %v2692, %v2688
    %v2694 = vlaneseq
    %v2695 = vshrl.u32 %v2694, 7
    %v2696 = vsub.s32 %v2649, %v2695
    %v2697 = vrot.slane %v2577, %v2696
    %v2698 = vsel %vm2654, %v2697, %v2693
    %v2699 = vlaneseq
    %v2700 = vshrl.u32 %v2699, 7
    %v2701 = vsub.s32 %v2656, %v2700
    %v2702 = vrot.slane %v2580, %v2701
    %v2703 = vsel %vm2661, %v2702, %v2698
    %v2704 = vlaneseq
    %v2705 = vshrl.u32 %v2704, 7
    %v2706 = vsub.s32 %v2663, %v2705
    %v2707 = vrot.slane %v2583, %v2706
    %v2708 = vsel %vm2668, %v2707, %v2703
    %vm2709 = vcmask 1041409
    %v2710 = vsel %vm2709, %v2708, %v2669
    %v2711 = vsel %vm1940, %v2710, 0
    %2713 = vmatprep.subr.mxu0 0.0
    %2714 = vmatpush1.msra.mxu0 %v2584
    %2715 = vmatprep.subr.mxu0 0.0
    %2716 = vmatpush1.msra.mxu0 %v2585
    %2717 = vmatprep.subr.mxu0 0.0
    %2718 = vmatpush1.msra.mxu0 %v2586
    %2719 = vmatprep.subr.mxu0 0.0
    %2720 = vmatpush1.msra.mxu0 %v2587
    %2721 = vmatprep.subr.mxu0 0.0
    %2722 = vmatpush1.msra.mxu0 %v2588
    %2723 = vmatprep.subr.mxu0 0.0
    %2724 = vmatpush1.msra.mxu0 %v2589
    %2725 = vmatprep.subr.mxu0 0.0
    %2726 = vmatpush1.msra.mxu0 %v2590
    %2727 = vmatprep.subr.mxu0 0.0
    %2728 = vmatpush1.msra.mxu0 %v2591
    %2729 = vmatprep.subr.mxu0 0.0
    %2730 = vmatpush1.msra.mxu0 0.0
    %2731 = vmatprep.subr.mxu0 0.0
    %2732 = vmatpush1.msra.mxu0 0.0
    %2733 = vmatprep.subr.mxu0 0.0
    %2734 = vmatpush1.msra.mxu0 0.0
    %2735 = vmatprep.subr.mxu0 0.0
    %2736 = vmatpush1.msra.mxu0 0.0
    %2737 = vmatprep.subr.mxu0 0.0
    %2738 = vmatpush1.msra.mxu0 0.0
    %2739 = vmatprep.subr.mxu0 0.0
    %2740 = vmatpush1.msra.mxu0 0.0
    %2741 = vmatprep.subr.mxu0 0.0
    %2742 = vmatpush1.msra.mxu0 0.0
    %2743 = vmatprep.subr.mxu0 0.0
    %2744 = vmatpush1.msra.mxu0 0.0
    %2745 = vmatprep.subr.mxu0 0.0
    %2746 = vmatpush1.msra.mxu0 0.0
    %2747 = vmatprep.subr.mxu0 0.0
    %2748 = vmatpush1.msra.mxu0 0.0
    %2749 = vmatprep.subr.mxu0 0.0
    %2750 = vmatpush1.msra.mxu0 0.0
    %2751 = vmatprep.subr.mxu0 0.0
    %2752 = vmatpush1.msra.mxu0 0.0
    %2753 = vmatprep.subr.mxu0 0.0
    %2754 = vmatpush1.msra.mxu0 0.0
    %2755 = vmatprep.subr.mxu0 0.0
    %2756 = vmatpush1.msra.mxu0 0.0
    %2757 = vmatprep.subr.mxu0 0.0
    %2758 = vmatpush1.msra.mxu0 0.0
    %2759 = vmatprep.subr.mxu0 0.0
    %2760 = vmatpush1.msra.mxu0 0.0
    %2761 = vmatprep.subr.mxu0 0.0
    %2762 = vmatpush1.msra.mxu0 0.0
    %2763 = vmatprep.subr.mxu0 0.0
    %2764 = vmatpush1.msra.mxu0 0.0
    %2765 = vmatprep.subr.mxu0 0.0
    %2766 = vmatpush1.msra.mxu0 0.0
    %2767 = vmatprep.subr.mxu0 0.0
    %2768 = vmatpush1.msra.mxu0 0.0
    %2769 = vmatprep.subr.mxu0 0.0
    %2770 = vmatpush1.msra.mxu0 0.0
    %2771 = vmatprep.subr.mxu0 0.0
    %2772 = vmatpush1.msra.mxu0 0.0
    %2773 = vmatprep.subr.mxu0 0.0
    %2774 = vmatpush1.msra.mxu0 0.0
    %2775 = vmatprep.subr.mxu0 0.0
    %2776 = vmatpush1.msra.mxu0 0.0
    %2777 = vmatprep.mubr.f32.mxu0 0.0
    %2778 = vmatmul.mubr.f32.gmra.mrb[0].mxu0 %v2711
    %v2779 = vpop.f32.mrb[0].mxu0
    %v2780 = vadd.f32 %v2597, %v2779
    %v2781 = vpop.f32.mrb[0].mxu0
    %2782 = vdwg.mxu0
    %vm2783 = vcmask 33792
    %2784 = vst.msk [vmem:[#allocation2] sm:$0x3] %vm2783, %v2780
    // Predicated region
    $region38: #{lstm_model_forward.1} parent=1 // pred_check
      _
    $region39: #{lstm_model_forward.1} parent=1 // pred_check_branch
      %2786 = sbr.rel (0) target = $region41
    $region40: #{lstm_model_forward.1} parent=1 // pred_region
      %s2788 = ssub.s32 32, 32
      %2789 = vsyncadd [#allocation3], %s2788
      %s2791 = sshll.u32 [#allocation2], 4
      %s2792 = int_to_ptr.vmem [resolvable:$true] %s2791
      %2794 = dma.vmem_to_hbm [thread:$0]  %s2792, 32, %s9, [#allocation3]
    $region41: #{lstm_model_forward.1} parent=1 // pred_fallthru
      _
    // Predicated region
    $region42: #{lstm_model_forward.1} parent=1 // pred_check
      _
    $region43: #{lstm_model_forward.1} parent=1 // pred_check_branch
      %2796 = sbr.rel (0) target = $region45
    $region44: #{lstm_model_forward.1} parent=1 // pred_region
      %2797 = dma.done [#allocation3], 32
    $region45: #{lstm_model_forward.1} parent=1 // pred_fallthru
      _
    %2798 = vsyncpa [#allocation3], 1

</llo_original>
